<compile_context>
chip_gen: v6e
topology: v6e:2x2x1
jax: 0.10.0
libtpu: 0.0.40
codegen_flags: <defaults>
</compile_context>

<pallas_src>
import functools

import jax
import jax.numpy as jnp
from jax import lax
from jax.experimental import pallas as pl
from jax.experimental.pallas import tpu as pltpu


_NEG_SLOPE = 0.01  # PyTorch nn.LeakyReLU() default


# ----------------------------- fused kernel --------------------------------

def _conv_lrelu(src_ref, hout, n_ref, b_row):
    """Stride-2 3x3 conv + LeakyReLU on a flat (TB*Hin, Win*Cin) activation ref.

    src_ref : (TB*Hin, Win*Cin) VMEM ref, Hin = 2*hout rows per image
    hout    : per-image output height (16 / 8 / 4)
    n_ref   : (3*Win*Cin, Wout*Cout) tap-fused folded conv weights
    b_row   : (1, Wout*Cout) bias row value
    returns : (TB*hout, Wout*Cout) activation value
    """
    m_out = src_ref.shape[0] // 2           # TB * hout
    wc = src_ref.shape[1]
    # Vertical taps via exact strided sublane reads (no MXU gather):
    even = src_ref[pl.ds(0, m_out, stride=2), :]    # rows 2i   -> tap kh=1
    odd = src_ref[pl.ds(1, m_out, stride=2), :]     # rows 2i+1 -> tap kh=2
    # tap kh=0 is rows 2i-1 = previous odd row; zero at the first output row
    # of every image (that tap falls on the zero padding).
    prev = jnp.concatenate(
        [jnp.zeros((1, wc), jnp.float32), odd[:m_out - 1, :]], axis=0)
    row_id = lax.broadcasted_iota(jnp.int32, (m_out, wc), 0)
    tap0 = jnp.where(row_id % hout == 0, 0.0, prev)
    # One fused K = 3*Win*Cin matmul per layer.
    lhs = jnp.concatenate([tap0, even, odd], axis=-1)       # (m_out, 3*wc)
    acc = jnp.dot(lhs, n_ref[...], preferred_element_type=jnp.float32)
    acc = acc + b_row
    return jnp.where(acc > 0, acc, _NEG_SLOPE * acc)


def _discriminator_kernel(x_ref, n1_ref, n2_ref, n3_ref, b_ref, lw_ref, lb_ref,
                          o_ref, a1_scr, a2_scr, a3_scr):
    b_all = b_ref[...]                                          # (3, 16*dim)
    a1_scr[...] = _conv_lrelu(x_ref, 16, n1_ref, b_all[0:1, :])   # (TB*16, 16d)
    a2_scr[...] = _conv_lrelu(a1_scr, 8, n2_ref, b_all[1:2, :])   # (TB*8,  16d)
    a3_scr[...] = _conv_lrelu(a2_scr, 4, n3_ref, b_all[2:3, :])   # (TB*4,  16d)
    # Linear(4*4*4*dim, 1): score_b = sum_h lw4[h,:] . a3[b*4+h,:] + lb,
    # producing all TB scores of this step as one lane row.
    tb = a3_scr.shape[0] // 4
    lw4 = lw_ref[...]                                           # (4, 16*dim)
    out_row = None
    for h in range(4):                                          # unrolled
        a_h = a3_scr[pl.ds(h, tb, stride=4), :]                 # (TB, 16*dim)
        part = jnp.dot(lw4[h:h + 1, :], a_h.T,
                       preferred_element_type=jnp.float32)      # (1, TB)
        out_row = part if out_row is None else out_row + part
    o_ref[...] = (out_row + lb_ref[...]).reshape(1, 1, tb)


# ------------------------ constant-operand builders -------------------------

def _folded_col_weights(w_oihw, win, wout):
    """N[kh, n*Cin+ci, j*Cout+co] = sum_kw [n == 2*j+kw-1] * W[co, ci, kh, kw].

    Built with exact 0/1 masking, so conv weights are placed bit-exactly;
    column OOB (zero padding) simply never matches.  Returns (3, win*cin,
    wout*cout); the caller reshapes to the tap-fused (3*win*cin, wout*cout).
    """
    cout, cin, _, _ = w_oihw.shape
    n_idx = jnp.arange(win)[:, None]            # (win, 1)
    j_idx = jnp.arange(wout)[None, :]           # (1, wout)
    n_full = jnp.zeros((3, win, cin, wout, cout), jnp.float32)
    for kw in range(3):
        mask = (n_idx == 2 * j_idx + kw - 1).astype(jnp.float32)   # (win, wout)
        w_k = jnp.transpose(w_oihw[:, :, :, kw], (2, 1, 0))        # (3, cin, cout)
        n_full = n_full + (mask[None, :, None, :, None]
                           * w_k[:, None, :, None, :])
    return n_full.reshape(3, win * cin, wout * cout)


# --------------------------------- wrapper ----------------------------------

def discriminator_forward(x_nchw, params, dim, tb=8):
    """Forward pass equivalent to Discriminator.forward (out_feat=False)."""
    # TODO(synk): the out_feat=True branch (return pre-linear features) is not
    # fused into this kernel; only the default out_feat=False path is built.
    B, nc, H, W = x_nchw.shape
    assert (H, W) == (32, 32), (
        "Discriminator's 4*4*4*dim flatten hard-codes 32x32 inputs")
    (w1, b1), (w2, b2), (w3, b3) = params["convs"]
    lw, lb = params["linear"]

    ncp = -(-nc // 4) * 4          # pad channels so layer-1 lanes = 32*ncp % 128 == 0
    b_pad = -(-B // tb) * tb       # pad batch to a multiple of images-per-step
    nsteps = b_pad // tb

    # Flat lane-dense (B*H, W*C) input layout, TB images per grid step.
    # TODO(synk): accepting NHWC input directly would drop this HBM transpose.
    x_nhwc = jnp.transpose(x_nchw, (0, 2, 3, 1))
    x_nhwc = jnp.pad(x_nhwc, ((0, b_pad - B), (0, 0), (0, 0), (0, ncp - nc)))
    x_flat = x_nhwc.reshape(b_pad * 32, 32 * ncp)

    # Tap-fused folded conv weights and stacked bias rows.
    w1p = jnp.pad(w1, ((0, 0), (0, ncp - nc), (0, 0), (0, 0)))
    n1 = _folded_col_weights(w1p, 32, 16).reshape(3 * 32 * ncp, 16 * dim)
    n2 = _folded_col_weights(w2, 16, 8).reshape(3 * 16 * dim, 16 * dim)
    n3 = _folded_col_weights(w3, 8, 4).reshape(3 * 16 * dim, 16 * dim)
    brow = jnp.stack([jnp.tile(b1, 16), jnp.tile(b2, 8), jnp.tile(b3, 4)])

    # Linear weight permuted from PyTorch's NCHW-flatten order (c*16 + h*4 + w)
    # to the kernel's (h, w*Cout + c) activation layout.
    lw4 = lw.reshape(4 * dim, 4, 4).transpose(1, 2, 0).reshape(4, 16 * dim)
    lb2 = lb.reshape(1, 1)

    const2 = lambda s: (0, 0)
    out = pl.pallas_call(
        _discriminator_kernel,
        out_shape=jax.ShapeDtypeStruct((nsteps, 1, tb), jnp.float32),
        grid=(nsteps,),
        in_specs=[
            pl.BlockSpec((tb * 32, 32 * ncp), lambda s: (s, 0)),
            pl.BlockSpec(n1.shape, const2),
            pl.BlockSpec(n2.shape, const2),
            pl.BlockSpec(n3.shape, const2),
            pl.BlockSpec(brow.shape, const2),
            pl.BlockSpec(lw4.shape, const2),
            pl.BlockSpec(lb2.shape, const2),
        ],
        out_specs=pl.BlockSpec((1, 1, tb), lambda s: (s, 0, 0)),
        scratch_shapes=[
            pltpu.VMEM((tb * 16, 16 * dim), jnp.float32),
            pltpu.VMEM((tb * 8, 16 * dim), jnp.float32),
            pltpu.VMEM((tb * 4, 16 * dim), jnp.float32),
        ],
        compiler_params=pltpu.CompilerParams(
            dimension_semantics=("parallel",)),  # steps shard over v7x's 2 TCs
    )(x_flat, n1, n2, n3, brow, lw4, lb2)
    return out.reshape(b_pad, 1)[:B]


# --------------------------- parameter setup --------------------------------

def init_params(key, dim, nc):
    def uniform(k, shape, fan_in):
        bound = 1.0 / jnp.sqrt(float(fan_in))
        return jax.random.uniform(k, shape, jnp.float32, -bound, bound)

    ks = jax.random.split(key, 8)
    convs = []
    chans = [(nc, dim), (dim, 2 * dim), (2 * dim, 4 * dim)]
    for i, (ci, co) in enumerate(chans):
        fan_in = ci * 3 * 3
        w = uniform(ks[2 * i], (co, ci, 3, 3), fan_in)      # OIHW (PyTorch)
        b = uniform(ks[2 * i + 1], (co,), fan_in)
        convs.append((w, b))
    lin_in = 4 * 4 * 4 * dim
    lw = uniform(ks[6], (1, lin_in), lin_in)
    lb = uniform(ks[7], (1,), lin_in)
    return {"convs": convs, "linear": (lw, lb)}


# ------------------------------- reference ----------------------------------

def reference_forward(x_nchw, params, dim):
    y = x_nchw
    for (w, b) in params["convs"]:
        y = jax.lax.conv_general_dilated(
            y, w, window_strides=(2, 2), padding=((1, 1), (1, 1)),
            dimension_numbers=("NCHW", "OIHW", "NCHW"))
        y = y + b[None, :, None, None]
        y = jnp.where(y > 0, y, _NEG_SLOPE * y)
    y = y.reshape(y.shape[0], 4 * 4 * 4 * dim)
    lw, lb = params["linear"]
    return y @ lw.T + lb


# --------------------------------- main --------------------------------------

if __name__ == "__main__":
    dim, zdim, nc = 8, 16, 3          # zdim is unused in forward (as in PyTorch)
    batch = 2
    key = jax.random.PRNGKey(0)
    k_x, k_p = jax.random.split(key)

    x = jax.random.normal(k_x, (batch, nc, 32, 32), dtype=jnp.float32)  # NCHW
    params = init_params(k_p, dim, nc)

    fwd = jax.jit(functools.partial(discriminator_forward, dim=dim))
    out = jax.block_until_ready(fwd(x, params))

    ref = reference_forward(x, params, dim)
    assert out.shape == (batch, 1), out.shape
    # All-f32 path; tolerance covers MXU default-precision (bf16-pass)
    # differences between the fused kernel and the XLA reference.
    assert jnp.allclose(out, ref, rtol=5e-3, atol=5e-3), (out, ref)

    print("KERNEL_OK")
</pallas_src>

<mosaic_0001>
module attributes {stable_mosaic.version = 11 : i64} {
  func.func @_discriminator_kernel(%arg0: i32, %arg1: memref<256x128xf32, #tpu.memory_space<vmem>>, %arg2: memref<384x128xf32, #tpu.memory_space<vmem>>, %arg3: memref<384x128xf32, #tpu.memory_space<vmem>>, %arg4: memref<384x128xf32, #tpu.memory_space<vmem>>, %arg5: memref<3x128xf32, #tpu.memory_space<vmem>>, %arg6: memref<4x128xf32, #tpu.memory_space<vmem>>, %arg7: memref<1x1xf32, #tpu.memory_space<vmem>>, %arg8: memref<1x1x8xf32, #tpu.memory_space<vmem>>, %arg9: memref<128x128xf32, #tpu.memory_space<vmem>>, %arg10: memref<64x128xf32, #tpu.memory_space<vmem>>, %arg11: memref<32x128xf32, #tpu.memory_space<vmem>>) attributes {dimension_semantics = [#tpu.dimension_semantics<parallel>], iteration_bounds = array<i64: 1>, scalar_prefetch = 0 : i64, scratch_operands = 3 : i64, tpu.core_type = #tpu.core_type<tc>, window_params = [{transform_indices = @transform_0, window_bounds = array<i64: 256, 128>}, {pipeline_mode = #tpu.pipeline_mode<synchronous>, transform_indices = @transform_1, window_bounds = array<i64: 384, 128>}, {pipeline_mode = #tpu.pipeline_mode<synchronous>, transform_indices = @transform_2, window_bounds = array<i64: 384, 128>}, {pipeline_mode = #tpu.pipeline_mode<synchronous>, transform_indices = @transform_3, window_bounds = array<i64: 384, 128>}, {pipeline_mode = #tpu.pipeline_mode<synchronous>, transform_indices = @transform_4, window_bounds = array<i64: 3, 128>}, {pipeline_mode = #tpu.pipeline_mode<synchronous>, transform_indices = @transform_5, window_bounds = array<i64: 4, 128>}, {pipeline_mode = #tpu.pipeline_mode<synchronous>, transform_indices = @transform_6, window_bounds = array<i64: 1, 1>}, {transform_indices = @transform_7, window_bounds = array<i64: 1, 1, 8>}]} {
    %c0 = arith.constant 0 : index
    %c0_0 = arith.constant 0 : index
    %0 = vector.load %arg5[%c0, %c0_0] : memref<3x128xf32, #tpu.memory_space<vmem>>, vector<3x128xf32>
    %1 = vector.extract_strided_slice %0 {offsets = [0, 0], sizes = [1, 128], strides = [1, 1]} : vector<3x128xf32> to vector<1x128xf32>
    %c0_1 = arith.constant 0 : index
    %c0_2 = arith.constant 0 : index
    %2 = tpu.strided_load %arg1[%c0_1, %c0_2] {strides = array<i32: 2, 1>} : memref<256x128xf32, #tpu.memory_space<vmem>>, vector<128x128xf32>
    %c1 = arith.constant 1 : index
    %c0_3 = arith.constant 0 : index
    %3 = tpu.strided_load %arg1[%c1, %c0_3] {strides = array<i32: 2, 1>} : memref<256x128xf32, #tpu.memory_space<vmem>>, vector<128x128xf32>
    %cst = arith.constant 0.000000e+00 : f32
    %4 = vector.broadcast %cst : f32 to vector<1x128xf32>
    %5 = vector.extract_strided_slice %3 {offsets = [0, 0], sizes = [127, 128], strides = [1, 1]} : vector<128x128xf32> to vector<127x128xf32>
    %6 = tpu.concatenate %4, %5 in 0 : vector<1x128xf32>, vector<127x128xf32> -> vector<128x128xf32>
    %7 = tpu.iota {dimensions = array<i32: 0>} : vector<128x128xi32>
    %c16_i32 = arith.constant 16 : i32
    %c0_i32 = arith.constant 0 : i32
    %8 = arith.cmpi eq, %c16_i32, %c0_i32 : i32
    %c1_i32 = arith.constant 1 : i32
    %9 = arith.select %8, %c1_i32, %c16_i32 : i32
    %10 = vector.broadcast %9 : i32 to vector<128x128xi32>
    %11 = arith.remsi %7, %10 : vector<128x128xi32>
    %c0_i32_4 = arith.constant 0 : i32
    %12 = vector.broadcast %c0_i32_4 : i32 to vector<128x128xi32>
    %13 = arith.cmpi ne, %11, %12 : vector<128x128xi32>
    %c0_i32_5 = arith.constant 0 : i32
    %14 = vector.broadcast %c0_i32_5 : i32 to vector<128x128xi32>
    %15 = arith.cmpi slt, %11, %14 : vector<128x128xi32>
    %c0_i32_6 = arith.constant 0 : i32
    %16 = arith.cmpi slt, %9, %c0_i32_6 : i32
    %17 = vector.broadcast %16 : i1 to vector<128x128xi1>
    %18 = vector.broadcast %17 : vector<128x128xi1> to vector<128x128xi1>
    %19 = arith.xori %15, %18 : vector<128x128xi1>
    %20 = arith.andi %19, %13 : vector<128x128xi1>
    %21 = vector.broadcast %9 : i32 to vector<128x128xi32>
    %22 = arith.addi %11, %21 : vector<128x128xi32>
    %23 = arith.select %20, %22, %11 : vector<128x128xi1>, vector<128x128xi32>
    %c0_i32_7 = arith.constant 0 : i32
    %24 = vector.broadcast %c0_i32_7 : i32 to vector<128x128xi32>
    %25 = arith.cmpi eq, %23, %24 : vector<128x128xi32>
    %cst_8 = arith.constant 0.000000e+00 : f32
    %26 = vector.broadcast %cst_8 : f32 to vector<128x128xf32>
    %27 = arith.select %25, %26, %6 : vector<128x128xi1>, vector<128x128xf32>
    %28 = tpu.concatenate %27, %2, %3 in 1 : vector<128x128xf32>, vector<128x128xf32>, vector<128x128xf32> -> vector<128x384xf32>
    %c0_9 = arith.constant 0 : index
    %c0_10 = arith.constant 0 : index
    %29 = vector.load %arg2[%c0_9, %c0_10] : memref<384x128xf32, #tpu.memory_space<vmem>>, vector<384x128xf32>
    %cst_11 = arith.constant dense<0.000000e+00> : vector<128x128xf32>
    %30 = tpu.matmul %28, %29, %cst_11 {dimension_numbers = #tpu.dot_dimension_numbers<[1], [0], [0], [1], [0, 0, 1, 1], [], []>} : vector<128x384xf32>, vector<384x128xf32>, vector<128x128xf32> -> vector<128x128xf32>
    %31 = vector.broadcast %1 : vector<1x128xf32> to vector<128x128xf32>
    %32 = arith.addf %30, %31 : vector<128x128xf32>
    %cst_12 = arith.constant 0.000000e+00 : f32
    %33 = vector.broadcast %cst_12 : f32 to vector<128x128xf32>
    %34 = arith.cmpf ogt, %32, %33 : vector<128x128xf32>
    %cst_13 = arith.constant 0.00999999977 : f32
    %35 = vector.broadcast %cst_13 : f32 to vector<128x128xf32>
    %36 = arith.mulf %35, %32 : vector<128x128xf32>
    %37 = arith.select %34, %32, %36 : vector<128x128xi1>, vector<128x128xf32>
    %c0_14 = arith.constant 0 : index
    %c0_15 = arith.constant 0 : index
    %38 = vector.load %arg9[%c0_14, %c0_15] : memref<128x128xf32, #tpu.memory_space<vmem>>, vector<128x128xf32>
    tpu.vector_store %arg9[%c0_14, %c0_15], %37 {strides = array<i32>} : memref<128x128xf32, #tpu.memory_space<vmem>>, vector<128x128xf32>,
    %39 = vector.extract_strided_slice %0 {offsets = [1, 0], sizes = [1, 128], strides = [1, 1]} : vector<3x128xf32> to vector<1x128xf32>
    %c0_16 = arith.constant 0 : index
    %c0_17 = arith.constant 0 : index
    %40 = tpu.strided_load %arg9[%c0_16, %c0_17] {strides = array<i32: 2, 1>} : memref<128x128xf32, #tpu.memory_space<vmem>>, vector<64x128xf32>
    %c1_18 = arith.constant 1 : index
    %c0_19 = arith.constant 0 : index
    %41 = tpu.strided_load %arg9[%c1_18, %c0_19] {strides = array<i32: 2, 1>} : memref<128x128xf32, #tpu.memory_space<vmem>>, vector<64x128xf32>
    %cst_20 = arith.constant 0.000000e+00 : f32
    %42 = vector.broadcast %cst_20 : f32 to vector<1x128xf32>
    %43 = vector.extract_strided_slice %41 {offsets = [0, 0], sizes = [63, 128], strides = [1, 1]} : vector<64x128xf32> to vector<63x128xf32>
    %44 = tpu.concatenate %42, %43 in 0 : vector<1x128xf32>, vector<63x128xf32> -> vector<64x128xf32>
    %45 = tpu.iota {dimensions = array<i32: 0>} : vector<64x128xi32>
    %c8_i32 = arith.constant 8 : i32
    %c0_i32_21 = arith.constant 0 : i32
    %46 = arith.cmpi eq, %c8_i32, %c0_i32_21 : i32
    %c1_i32_22 = arith.constant 1 : i32
    %47 = arith.select %46, %c1_i32_22, %c8_i32 : i32
    %48 = vector.broadcast %47 : i32 to vector<64x128xi32>
    %49 = arith.remsi %45, %48 : vector<64x128xi32>
    %c0_i32_23 = arith.constant 0 : i32
    %50 = vector.broadcast %c0_i32_23 : i32 to vector<64x128xi32>
    %51 = arith.cmpi ne, %49, %50 : vector<64x128xi32>
    %c0_i32_24 = arith.constant 0 : i32
    %52 = vector.broadcast %c0_i32_24 : i32 to vector<64x128xi32>
    %53 = arith.cmpi slt, %49, %52 : vector<64x128xi32>
    %c0_i32_25 = arith.constant 0 : i32
    %54 = arith.cmpi slt, %47, %c0_i32_25 : i32
    %55 = vector.broadcast %54 : i1 to vector<64x128xi1>
    %56 = vector.broadcast %55 : vector<64x128xi1> to vector<64x128xi1>
    %57 = arith.xori %53, %56 : vector<64x128xi1>
    %58 = arith.andi %57, %51 : vector<64x128xi1>
    %59 = vector.broadcast %47 : i32 to vector<64x128xi32>
    %60 = arith.addi %49, %59 : vector<64x128xi32>
    %61 = arith.select %58, %60, %49 : vector<64x128xi1>, vector<64x128xi32>
    %c0_i32_26 = arith.constant 0 : i32
    %62 = vector.broadcast %c0_i32_26 : i32 to vector<64x128xi32>
    %63 = arith.cmpi eq, %61, %62 : vector<64x128xi32>
    %cst_27 = arith.constant 0.000000e+00 : f32
    %64 = vector.broadcast %cst_27 : f32 to vector<64x128xf32>
    %65 = arith.select %63, %64, %44 : vector<64x128xi1>, vector<64x128xf32>
    %66 = tpu.concatenate %65, %40, %41 in 1 : vector<64x128xf32>, vector<64x128xf32>, vector<64x128xf32> -> vector<64x384xf32>
    %c0_28 = arith.constant 0 : index
    %c0_29 = arith.constant 0 : index
    %67 = vector.load %arg3[%c0_28, %c0_29] : memref<384x128xf32, #tpu.memory_space<vmem>>, vector<384x128xf32>
    %cst_30 = arith.constant dense<0.000000e+00> : vector<64x128xf32>
    %68 = tpu.matmul %66, %67, %cst_30 {dimension_numbers = #tpu.dot_dimension_numbers<[1], [0], [0], [1], [0, 0, 1, 1], [], []>} : vector<64x384xf32>, vector<384x128xf32>, vector<64x128xf32> -> vector<64x128xf32>
    %69 = vector.broadcast %39 : vector<1x128xf32> to vector<64x128xf32>
    %70 = arith.addf %68, %69 : vector<64x128xf32>
    %cst_31 = arith.constant 0.000000e+00 : f32
    %71 = vector.broadcast %cst_31 : f32 to vector<64x128xf32>
    %72 = arith.cmpf ogt, %70, %71 : vector<64x128xf32>
    %cst_32 = arith.constant 0.00999999977 : f32
    %73 = vector.broadcast %cst_32 : f32 to vector<64x128xf32>
    %74 = arith.mulf %73, %70 : vector<64x128xf32>
    %75 = arith.select %72, %70, %74 : vector<64x128xi1>, vector<64x128xf32>
    %c0_33 = arith.constant 0 : index
    %c0_34 = arith.constant 0 : index
    %76 = vector.load %arg10[%c0_33, %c0_34] : memref<64x128xf32, #tpu.memory_space<vmem>>, vector<64x128xf32>
    tpu.vector_store %arg10[%c0_33, %c0_34], %75 {strides = array<i32>} : memref<64x128xf32, #tpu.memory_space<vmem>>, vector<64x128xf32>,
    %77 = vector.extract_strided_slice %0 {offsets = [2, 0], sizes = [1, 128], strides = [1, 1]} : vector<3x128xf32> to vector<1x128xf32>
    %c0_35 = arith.constant 0 : index
    %c0_36 = arith.constant 0 : index
    %78 = tpu.strided_load %arg10[%c0_35, %c0_36] {strides = array<i32: 2, 1>} : memref<64x128xf32, #tpu.memory_space<vmem>>, vector<32x128xf32>
    %c1_37 = arith.constant 1 : index
    %c0_38 = arith.constant 0 : index
    %79 = tpu.strided_load %arg10[%c1_37, %c0_38] {strides = array<i32: 2, 1>} : memref<64x128xf32, #tpu.memory_space<vmem>>, vector<32x128xf32>
    %cst_39 = arith.constant 0.000000e+00 : f32
    %80 = vector.broadcast %cst_39 : f32 to vector<1x128xf32>
    %81 = vector.extract_strided_slice %79 {offsets = [0, 0], sizes = [31, 128], strides = [1, 1]} : vector<32x128xf32> to vector<31x128xf32>
    %82 = tpu.concatenate %80, %81 in 0 : vector<1x128xf32>, vector<31x128xf32> -> vector<32x128xf32>
    %83 = tpu.iota {dimensions = array<i32: 0>} : vector<32x128xi32>
    %c4_i32 = arith.constant 4 : i32
    %c0_i32_40 = arith.constant 0 : i32
    %84 = arith.cmpi eq, %c4_i32, %c0_i32_40 : i32
    %c1_i32_41 = arith.constant 1 : i32
    %85 = arith.select %84, %c1_i32_41, %c4_i32 : i32
    %86 = vector.broadcast %85 : i32 to vector<32x128xi32>
    %87 = arith.remsi %83, %86 : vector<32x128xi32>
    %c0_i32_42 = arith.constant 0 : i32
    %88 = vector.broadcast %c0_i32_42 : i32 to vector<32x128xi32>
    %89 = arith.cmpi ne, %87, %88 : vector<32x128xi32>
    %c0_i32_43 = arith.constant 0 : i32
    %90 = vector.broadcast %c0_i32_43 : i32 to vector<32x128xi32>
    %91 = arith.cmpi slt, %87, %90 : vector<32x128xi32>
    %c0_i32_44 = arith.constant 0 : i32
    %92 = arith.cmpi slt, %85, %c0_i32_44 : i32
    %93 = vector.broadcast %92 : i1 to vector<32x128xi1>
    %94 = vector.broadcast %93 : vector<32x128xi1> to vector<32x128xi1>
    %95 = arith.xori %91, %94 : vector<32x128xi1>
    %96 = arith.andi %95, %89 : vector<32x128xi1>
    %97 = vector.broadcast %85 : i32 to vector<32x128xi32>
    %98 = arith.addi %87, %97 : vector<32x128xi32>
    %99 = arith.select %96, %98, %87 : vector<32x128xi1>, vector<32x128xi32>
    %c0_i32_45 = arith.constant 0 : i32
    %100 = vector.broadcast %c0_i32_45 : i32 to vector<32x128xi32>
    %101 = arith.cmpi eq, %99, %100 : vector<32x128xi32>
    %cst_46 = arith.constant 0.000000e+00 : f32
    %102 = vector.broadcast %cst_46 : f32 to vector<32x128xf32>
    %103 = arith.select %101, %102, %82 : vector<32x128xi1>, vector<32x128xf32>
    %104 = tpu.concatenate %103, %78, %79 in 1 : vector<32x128xf32>, vector<32x128xf32>, vector<32x128xf32> -> vector<32x384xf32>
    %c0_47 = arith.constant 0 : index
    %c0_48 = arith.constant 0 : index
    %105 = vector.load %arg4[%c0_47, %c0_48] : memref<384x128xf32, #tpu.memory_space<vmem>>, vector<384x128xf32>
    %cst_49 = arith.constant dense<0.000000e+00> : vector<32x128xf32>
    %106 = tpu.matmul %104, %105, %cst_49 {dimension_numbers = #tpu.dot_dimension_numbers<[1], [0], [0], [1], [0, 0, 1, 1], [], []>} : vector<32x384xf32>, vector<384x128xf32>, vector<32x128xf32> -> vector<32x128xf32>
    %107 = vector.broadcast %77 : vector<1x128xf32> to vector<32x128xf32>
    %108 = arith.addf %106, %107 : vector<32x128xf32>
    %cst_50 = arith.constant 0.000000e+00 : f32
    %109 = vector.broadcast %cst_50 : f32 to vector<32x128xf32>
    %110 = arith.cmpf ogt, %108, %109 : vector<32x128xf32>
    %cst_51 = arith.constant 0.00999999977 : f32
    %111 = vector.broadcast %cst_51 : f32 to vector<32x128xf32>
    %112 = arith.mulf %111, %108 : vector<32x128xf32>
    %113 = arith.select %110, %108, %112 : vector<32x128xi1>, vector<32x128xf32>
    %c0_52 = arith.constant 0 : index
    %c0_53 = arith.constant 0 : index
    %114 = vector.load %arg11[%c0_52, %c0_53] : memref<32x128xf32, #tpu.memory_space<vmem>>, vector<32x128xf32>
    tpu.vector_store %arg11[%c0_52, %c0_53], %113 {strides = array<i32>} : memref<32x128xf32, #tpu.memory_space<vmem>>, vector<32x128xf32>,
    %c0_54 = arith.constant 0 : index
    %c0_55 = arith.constant 0 : index
    %115 = vector.load %arg6[%c0_54, %c0_55] : memref<4x128xf32, #tpu.memory_space<vmem>>, vector<4x128xf32>
    %c0_56 = arith.constant 0 : index
    %c0_57 = arith.constant 0 : index
    %116 = tpu.strided_load %arg11[%c0_56, %c0_57] {strides = array<i32: 4, 1>} : memref<32x128xf32, #tpu.memory_space<vmem>>, vector<8x128xf32>
    %117 = vector.extract_strided_slice %115 {offsets = [0, 0], sizes = [1, 128], strides = [1, 1]} : vector<4x128xf32> to vector<1x128xf32>
    %118 = tpu.transpose %116, [1, 0] : vector<8x128xf32> -> vector<128x8xf32>
    %cst_58 = arith.constant dense<0.000000e+00> : vector<1x8xf32>
    %119 = tpu.matmul %117, %118, %cst_58 {dimension_numbers = #tpu.dot_dimension_numbers<[1], [0], [0], [1], [0, 0, 1, 1], [], []>} : vector<1x128xf32>, vector<128x8xf32>, vector<1x8xf32> -> vector<1x8xf32>
    %c1_59 = arith.constant 1 : index
    %c0_60 = arith.constant 0 : index
    %120 = tpu.strided_load %arg11[%c1_59, %c0_60] {strides = array<i32: 4, 1>} : memref<32x128xf32, #tpu.memory_space<vmem>>, vector<8x128xf32>
    %121 = vector.extract_strided_slice %115 {offsets = [1, 0], sizes = [1, 128], strides = [1, 1]} : vector<4x128xf32> to vector<1x128xf32>
    %122 = tpu.transpose %120, [1, 0] : vector<8x128xf32> -> vector<128x8xf32>
    %cst_61 = arith.constant dense<0.000000e+00> : vector<1x8xf32>
    %123 = tpu.matmul %121, %122, %cst_61 {dimension_numbers = #tpu.dot_dimension_numbers<[1], [0], [0], [1], [0, 0, 1, 1], [], []>} : vector<1x128xf32>, vector<128x8xf32>, vector<1x8xf32> -> vector<1x8xf32>
    %124 = arith.addf %119, %123 : vector<1x8xf32>
    %c2 = arith.constant 2 : index
    %c0_62 = arith.constant 0 : index
    %125 = tpu.strided_load %arg11[%c2, %c0_62] {strides = array<i32: 4, 1>} : memref<32x128xf32, #tpu.memory_space<vmem>>, vector<8x128xf32>
    %126 = vector.extract_strided_slice %115 {offsets = [2, 0], sizes = [1, 128], strides = [1, 1]} : vector<4x128xf32> to vector<1x128xf32>
    %127 = tpu.transpose %125, [1, 0] : vector<8x128xf32> -> vector<128x8xf32>
    %cst_63 = arith.constant dense<0.000000e+00> : vector<1x8xf32>
    %128 = tpu.matmul %126, %127, %cst_63 {dimension_numbers = #tpu.dot_dimension_numbers<[1], [0], [0], [1], [0, 0, 1, 1], [], []>} : vector<1x128xf32>, vector<128x8xf32>, vector<1x8xf32> -> vector<1x8xf32>
    %129 = arith.addf %124, %128 : vector<1x8xf32>
    %c3 = arith.constant 3 : index
    %c0_64 = arith.constant 0 : index
    %130 = tpu.strided_load %arg11[%c3, %c0_64] {strides = array<i32: 4, 1>} : memref<32x128xf32, #tpu.memory_space<vmem>>, vector<8x128xf32>
    %131 = vector.extract_strided_slice %115 {offsets = [3, 0], sizes = [1, 128], strides = [1, 1]} : vector<4x128xf32> to vector<1x128xf32>
    %132 = tpu.transpose %130, [1, 0] : vector<8x128xf32> -> vector<128x8xf32>
    %cst_65 = arith.constant dense<0.000000e+00> : vector<1x8xf32>
    %133 = tpu.matmul %131, %132, %cst_65 {dimension_numbers = #tpu.dot_dimension_numbers<[1], [0], [0], [1], [0, 0, 1, 1], [], []>} : vector<1x128xf32>, vector<128x8xf32>, vector<1x8xf32> -> vector<1x8xf32>
    %134 = arith.addf %129, %133 : vector<1x8xf32>
    %c0_66 = arith.constant 0 : index
    %c0_67 = arith.constant 0 : index
    %135 = vector.load %arg7[%c0_66, %c0_67] : memref<1x1xf32, #tpu.memory_space<vmem>>, vector<1x1xf32>
    %136 = vector.broadcast %135 : vector<1x1xf32> to vector<1x8xf32>
    %137 = arith.addf %134, %136 : vector<1x8xf32>
    %138 = vector.shape_cast %137 : vector<1x8xf32> to vector<1x1x8xf32>
    %c0_68 = arith.constant 0 : index
    %c0_69 = arith.constant 0 : index
    %c0_70 = arith.constant 0 : index
    %139 = vector.load %arg8[%c0_68, %c0_69, %c0_70] : memref<1x1x8xf32, #tpu.memory_space<vmem>>, vector<1x1x8xf32>
    tpu.vector_store %arg8[%c0_68, %c0_69, %c0_70], %138 {strides = array<i32>} : memref<1x1x8xf32, #tpu.memory_space<vmem>>, vector<1x1x8xf32>,
    return
  }
  func.func @transform_0(%arg0: i32) -> (i32, i32) {
    %c0_i32 = arith.constant 0 : i32
    %c0_i32_0 = arith.constant 0 : i32
    return %arg0, %c0_i32 : i32, i32
  }
  func.func @transform_1(%arg0: i32) -> (i32, i32) {
    %c0_i32 = arith.constant 0 : i32
    %c0_i32_0 = arith.constant 0 : i32
    %c0_i32_1 = arith.constant 0 : i32
    return %c0_i32, %c0_i32_0 : i32, i32
  }
  func.func @transform_2(%arg0: i32) -> (i32, i32) {
    %c0_i32 = arith.constant 0 : i32
    %c0_i32_0 = arith.constant 0 : i32
    %c0_i32_1 = arith.constant 0 : i32
    return %c0_i32, %c0_i32_0 : i32, i32
  }
  func.func @transform_3(%arg0: i32) -> (i32, i32) {
    %c0_i32 = arith.constant 0 : i32
    %c0_i32_0 = arith.constant 0 : i32
    %c0_i32_1 = arith.constant 0 : i32
    return %c0_i32, %c0_i32_0 : i32, i32
  }
  func.func @transform_4(%arg0: i32) -> (i32, i32) {
    %c0_i32 = arith.constant 0 : i32
    %c0_i32_0 = arith.constant 0 : i32
    %c0_i32_1 = arith.constant 0 : i32
    return %c0_i32, %c0_i32_0 : i32, i32
  }
  func.func @transform_5(%arg0: i32) -> (i32, i32) {
    %c0_i32 = arith.constant 0 : i32
    %c0_i32_0 = arith.constant 0 : i32
    %c0_i32_1 = arith.constant 0 : i32
    return %c0_i32, %c0_i32_0 : i32, i32
  }
  func.func @transform_6(%arg0: i32) -> (i32, i32) {
    %c0_i32 = arith.constant 0 : i32
    %c0_i32_0 = arith.constant 0 : i32
    %c0_i32_1 = arith.constant 0 : i32
    return %c0_i32, %c0_i32_0 : i32, i32
  }
  func.func @transform_7(%arg0: i32) -> (i32, i32, i32) {
    %c0_i32 = arith.constant 0 : i32
    %c0_i32_0 = arith.constant 0 : i32
    %c0_i32_1 = arith.constant 0 : i32
    return %arg0, %c0_i32, %c0_i32_0 : i32, i32, i32
  }
}

</mosaic_0001>

<llo_original>
// kernel: tile.18
$region0: #{tile.18}
  #allocation0 [shape = 's32[1]{0}', space=sflag, size = 0x4, scoped, tag = 'scoped memory for tile.18']
  %s0 = inlined_call_operand.vmem [shape: f32[8], index: 0, kind: input, shape index: {}]
  %s1 = inlined_call_operand.vmem [shape: f32[16,8], index: 1, kind: output, shape index: {}]
  // Predicated region
  $region2: #{tile.18} parent=0 // pred_check
    _
  $region3: #{tile.18} parent=0 // pred_check_branch
    %3 = sbr.rel (0) target = $region5
  $region4: #{tile.18} parent=0 // pred_region
    _
  $region5: #{tile.18} parent=0 // pred_fallthru
    _
  %v4 = vld [vmem:[%s0] ss:$0 sm:$0xff]
  %5 = vst [vmem:[%s1] sm:$0xff] %v4
  %s6 = scalar_lea.vmem %s1, 8
  %7 = vst [vmem:[%s6] sm:$0xff] %v4

// kernel: tile.27
$region0: #{tile.27}
  %s0 = inlined_call_operand.vmem [shape: f32[16,8], index: 0, kind: input, shape index: {}]
  %s1 = inlined_call_operand.vmem [shape: f32[1,128], index: 1, kind: output, shape index: {}]
  $region1: #{tile.27} parent=0
    #allocation0 [shape = 'u8[4096]{0}', space=vmem, size = 0x1000, scoped, tag = 'scoped mem for output reshape']
    %v2 = vld [vmem:[%s0] sm:$0x1]
    %vm3 = vcmask 64512
    %4 = vst.msk [vmem:[#allocation0] sm:$0x1] %vm3, %v2
    %s5 = scalar_lea.vmem %s0, 15
    %v6 = vld [vmem:[%s5] sm:$0x1]
    %7 = vrot.lane.b32.xlu0 %v6, 120
    %v8 = vpop.permute.xlu0 %7
    %vm9 = vcmask 1048512
    %10 = vst.msk [vmem:[#allocation0] sm:$0x1] %vm9, %v8
    %s11 = scalar_lea.vmem %s0, 14
    %v12 = vld [vmem:[%s11] sm:$0x1]
    %13 = vrot.lane.b32.xlu0 %v12, 112
    %v14 = vpop.permute.xlu0 %13
    %vm15 = vcmask 982912
    %16 = vst.msk [vmem:[#allocation0] sm:$0x1] %vm15, %v14
    %s17 = scalar_lea.vmem %s0, 13
    %v18 = vld [vmem:[%s17] sm:$0x1]
    %19 = vrot.lane.b32.xlu0 %v18, 104
    %v20 = vpop.permute.xlu0 %19
    %vm21 = vcmask 917312
    %22 = vst.msk [vmem:[#allocation0] sm:$0x1] %vm21, %v20
    %s23 = scalar_lea.vmem %s0, 12
    %v24 = vld [vmem:[%s23] sm:$0x1]
    %25 = vrot.lane.b32.xlu0 %v24, 96
    %v26 = vpop.permute.xlu0 %25
    %vm27 = vcmask 851712
    %28 = vst.msk [vmem:[#allocation0] sm:$0x1] %vm27, %v26
    %s29 = scalar_lea.vmem %s0, 11
    %v30 = vld [vmem:[%s29] sm:$0x1]
    %31 = vrot.lane.b32.xlu0 %v30, 88
    %v32 = vpop.permute.xlu0 %31
    %vm33 = vcmask 786112
    %34 = vst.msk [vmem:[#allocation0] sm:$0x1] %vm33, %v32
    %s35 = scalar_lea.vmem %s0, 10
    %v36 = vld [vmem:[%s35] sm:$0x1]
    %37 = vrot.lane.b32.xlu0 %v36, 80
    %v38 = vpop.permute.xlu0 %37
    %vm39 = vcmask 720512
    %40 = vst.msk [vmem:[#allocation0] sm:$0x1] %vm39, %v38
    %s41 = scalar_lea.vmem %s0, 9
    %v42 = vld [vmem:[%s41] sm:$0x1]
    %43 = vrot.lane.b32.xlu0 %v42, 72
    %v44 = vpop.permute.xlu0 %43
    %vm45 = vcmask 654912
    %46 = vst.msk [vmem:[#allocation0] sm:$0x1] %vm45, %v44
    %s47 = scalar_lea.vmem %s0, 8
    %v48 = vld [vmem:[%s47] sm:$0x1]
    %49 = vrot.lane.b32.xlu0 %v48, 64
    %v50 = vpop.permute.xlu0 %49
    %vm51 = vcmask 589312
    %52 = vst.msk [vmem:[#allocation0] sm:$0x1] %vm51, %v50
    %s53 = scalar_lea.vmem %s0, 7
    %v54 = vld [vmem:[%s53] sm:$0x1]
    %55 = vrot.lane.b32.xlu0 %v54, 56
    %v56 = vpop.permute.xlu0 %55
    %vm57 = vcmask 523712
    %58 = vst.msk [vmem:[#allocation0] sm:$0x1] %vm57, %v56
    %s59 = scalar_lea.vmem %s0, 6
    %v60 = vld [vmem:[%s59] sm:$0x1]
    %61 = vrot.lane.b32.xlu0 %v60, 48
    %v62 = vpop.permute.xlu0 %61
    %vm63 = vcmask 458112
    %64 = vst.msk [vmem:[#allocation0] sm:$0x1] %vm63, %v62
    %s65 = scalar_lea.vmem %s0, 5
    %v66 = vld [vmem:[%s65] sm:$0x1]
    %67 = vrot.lane.b32.xlu0 %v66, 40
    %v68 = vpop.permute.xlu0 %67
    %vm69 = vcmask 392512
    %70 = vst.msk [vmem:[#allocation0] sm:$0x1] %vm69, %v68
    %s71 = scalar_lea.vmem %s0, 4
    %v72 = vld [vmem:[%s71] sm:$0x1]
    %73 = vrot.lane.b32.xlu0 %v72, 32
    %v74 = vpop.permute.xlu0 %73
    %vm75 = vcmask 326912
    %76 = vst.msk [vmem:[#allocation0] sm:$0x1] %vm75, %v74
    %s77 = scalar_lea.vmem %s0, 3
    %v78 = vld [vmem:[%s77] sm:$0x1]
    %79 = vrot.lane.b32.xlu0 %v78, 24
    %v80 = vpop.permute.xlu0 %79
    %vm81 = vcmask 261312
    %82 = vst.msk [vmem:[#allocation0] sm:$0x1] %vm81, %v80
    %s83 = scalar_lea.vmem %s0, 2
    %v84 = vld [vmem:[%s83] sm:$0x1]
    %85 = vrot.lane.b32.xlu0 %v84, 16
    %v86 = vpop.permute.xlu0 %85
    %vm87 = vcmask 195712
    %88 = vst.msk [vmem:[#allocation0] sm:$0x1] %vm87, %v86
    %s89 = scalar_lea.vmem %s0, 1
    %v90 = vld [vmem:[%s89] sm:$0x1]
    %91 = vrot.lane.b32.xlu0 %v90, 8
    %v92 = vpop.permute.xlu0 %91
    %vm93 = vcmask 130112
    %94 = vst.msk [vmem:[#allocation0] sm:$0x1] %vm93, %v92
    %s96 = sshll.u32 1, 1
    %s97 = ssub.s32 %s96, 1
    %v99 = vld [vmem:[#allocation0] sm:%s97]
    %s100 = sshll.u32 1, 1
    %s101 = ssub.s32 %s100, 1
    %102 = vst [vmem:[%s1] sm:%s101] %v99

// kernel: tile.22
$region0: #{tile.22}
  #allocation0 [shape = 's32[1]{0}', space=sflag, size = 0x4, scoped, tag = 'scoped memory for tile.22']
  %s0 = inlined_call_operand.vmem [shape: f32[16], index: 0, kind: input, shape index: {}]
  %s1 = inlined_call_operand.vmem [shape: f32[8,16], index: 1, kind: output, shape index: {}]
  // Predicated region
  $region2: #{tile.22} parent=0 // pred_check
    _
  $region3: #{tile.22} parent=0 // pred_check_branch
    %3 = sbr.rel (0) target = $region5
  $region4: #{tile.22} parent=0 // pred_region
    _
  $region5: #{tile.22} parent=0 // pred_fallthru
    _
  %v4 = vld [vmem:[%s0] ss:$0 sm:$0xff]
  %5 = vst [vmem:[%s1] sm:$0xff] %v4

// kernel: tile.28
$region0: #{tile.28}
  %s0 = inlined_call_operand.vmem [shape: f32[8,16], index: 0, kind: input, shape index: {}]
  %s1 = inlined_call_operand.vmem [shape: f32[1,128], index: 1, kind: output, shape index: {}]
  $region1: #{tile.28} parent=0
    #allocation0 [shape = 'u8[4096]{0}', space=vmem, size = 0x1000, scoped, tag = 'scoped mem for output reshape']
    %v2 = vld [vmem:[%s0] sm:$0x1]
    %vm3 = vcmask 130048
    %4 = vst.msk [vmem:[#allocation0] sm:$0x1] %vm3, %v2
    %s5 = scalar_lea.vmem %s0, 7
    %v6 = vld [vmem:[%s5] sm:$0x1]
    %7 = vrot.lane.b32.xlu0 %v6, 112
    %v8 = vpop.permute.xlu0 %7
    %vm9 = vcmask 1048448
    %10 = vst.msk [vmem:[#allocation0] sm:$0x1] %vm9, %v8
    %s11 = scalar_lea.vmem %s0, 6
    %v12 = vld [vmem:[%s11] sm:$0x1]
    %13 = vrot.lane.b32.xlu0 %v12, 96
    %v14 = vpop.permute.xlu0 %13
    %vm15 = vcmask 917248
    %16 = vst.msk [vmem:[#allocation0] sm:$0x1] %vm15, %v14
    %s17 = scalar_lea.vmem %s0, 5
    %v18 = vld [vmem:[%s17] sm:$0x1]
    %19 = vrot.lane.b32.xlu0 %v18, 80
    %v20 = vpop.permute.xlu0 %19
    %vm21 = vcmask 786048
    %22 = vst.msk [vmem:[#allocation0] sm:$0x1] %vm21, %v20
    %s23 = scalar_lea.vmem %s0, 4
    %v24 = vld [vmem:[%s23] sm:$0x1]
    %25 = vrot.lane.b32.xlu0 %v24, 64
    %v26 = vpop.permute.xlu0 %25
    %vm27 = vcmask 654848
    %28 = vst.msk [vmem:[#allocation0] sm:$0x1] %vm27, %v26
    %s29 = scalar_lea.vmem %s0, 3
    %v30 = vld [vmem:[%s29] sm:$0x1]
    %31 = vrot.lane.b32.xlu0 %v30, 48
    %v32 = vpop.permute.xlu0 %31
    %vm33 = vcmask 523648
    %34 = vst.msk [vmem:[#allocation0] sm:$0x1] %vm33, %v32
    %s35 = scalar_lea.vmem %s0, 2
    %v36 = vld [vmem:[%s35] sm:$0x1]
    %37 = vrot.lane.b32.xlu0 %v36, 32
    %v38 = vpop.permute.xlu0 %37
    %vm39 = vcmask 392448
    %40 = vst.msk [vmem:[#allocation0] sm:$0x1] %vm39, %v38
    %s41 = scalar_lea.vmem %s0, 1
    %v42 = vld [vmem:[%s41] sm:$0x1]
    %43 = vrot.lane.b32.xlu0 %v42, 16
    %v44 = vpop.permute.xlu0 %43
    %vm45 = vcmask 261248
    %46 = vst.msk [vmem:[#allocation0] sm:$0x1] %vm45, %v44
    %s48 = sshll.u32 1, 1
    %s49 = ssub.s32 %s48, 1
    %v51 = vld [vmem:[#allocation0] sm:%s49]
    %s52 = sshll.u32 1, 1
    %s53 = ssub.s32 %s52, 1
    %54 = vst [vmem:[%s1] sm:%s53] %v51

// kernel: tile.26
$region0: #{tile.26}
  #allocation0 [shape = 's32[1]{0}', space=sflag, size = 0x4, scoped, tag = 'scoped memory for tile.26']
  %s0 = inlined_call_operand.vmem [shape: f32[32], index: 0, kind: input, shape index: {}]
  %s1 = inlined_call_operand.vmem [shape: f32[4,32], index: 1, kind: output, shape index: {}]
  // Predicated region
  $region2: #{tile.26} parent=0 // pred_check
    _
  $region3: #{tile.26} parent=0 // pred_check_branch
    %3 = sbr.rel (0) target = $region5
  $region4: #{tile.26} parent=0 // pred_region
    _
  $region5: #{tile.26} parent=0 // pred_fallthru
    _
  %v4 = vld [vmem:[%s0] ss:$0 sm:$0xff]
  %5 = vst [vmem:[%s1] sm:$0xf] %v4

// kernel: tile.29
$region0: #{tile.29}
  %s0 = inlined_call_operand.vmem [shape: f32[4,32], index: 0, kind: input, shape index: {}]
  %s1 = inlined_call_operand.vmem [shape: f32[1,128], index: 1, kind: output, shape index: {}]
  $region1: #{tile.29} parent=0
    #allocation0 [shape = 'u8[4096]{0}', space=vmem, size = 0x1000, scoped, tag = 'scoped mem for output reshape']
    #allocation1 [shape = 'u8[4096]{0}', space=vmem, size = 0x1000, scoped, tag = 'scoped mem for input reshape']
    %s3 = sshll.u32 1, 4
    %s4 = ssub.s32 %s3, 1
    %v5 = vld [vmem:[%s0] sm:%s4]
    %6 = vst [vmem:[#allocation1] sm:%s4] %v5
    %v7 = vld [vmem:[#allocation1] sm:$0x1]
    %vm8 = vcmask 261120
    %9 = vst.msk [vmem:[#allocation0] sm:$0x1] %vm8, %v7
    %s10 = scalar_lea.vmem [#allocation1], 3
    %v11 = vld [vmem:[%s10] sm:$0x1]
    %12 = vrot.lane.b32.xlu0 %v11, 96
    %v13 = vpop.permute.xlu0 %12
    %vm14 = vcmask 1048320
    %15 = vst.msk [vmem:[#allocation0] sm:$0x1] %vm14, %v13
    %s16 = scalar_lea.vmem [#allocation1], 2
    %v17 = vld [vmem:[%s16] sm:$0x1]
    %18 = vrot.lane.b32.xlu0 %v17, 64
    %v19 = vpop.permute.xlu0 %18
    %vm20 = vcmask 785920
    %21 = vst.msk [vmem:[#allocation0] sm:$0x1] %vm20, %v19
    %s22 = scalar_lea.vmem [#allocation1], 1
    %v23 = vld [vmem:[%s22] sm:$0x1]
    %24 = vrot.lane.b32.xlu0 %v23, 32
    %v25 = vpop.permute.xlu0 %24
    %vm26 = vcmask 523520
    %27 = vst.msk [vmem:[#allocation0] sm:$0x1] %vm26, %v25
    %s29 = sshll.u32 1, 1
    %s30 = ssub.s32 %s29, 1
    %v32 = vld [vmem:[#allocation0] sm:%s30]
    %s33 = sshll.u32 1, 1
    %s34 = ssub.s32 %s33, 1
    %35 = vst [vmem:[%s1] sm:%s34] %v32

// kernel: discriminator_forward.1
$region0: #{discriminator_forward.1}
  #allocation0 [shape = 'u32[]', space=smem, size = 0x4, offset = 0x4, fixed_abs, tag = 'smem constant byte address 0x4 - core index']
  #allocation1 [shape = 'u32[144,128]{1,0:T(1,128)}', space=vmem, size = 0x12000, scoped, tag = 'internal scratch']
  #allocation2 [shape = 'f32[128,128]{1,0:T(8,128)}', space=vmem, size = 0x10000, scoped, tag = 'scratch operand']
  #allocation3 [shape = 'f32[64,128]{1,0:T(8,128)}', space=vmem, size = 0x8000, scoped, tag = 'scratch operand']
  #allocation4 [shape = 'f32[32,128]{1,0:T(8,128)}', space=vmem, size = 0x4000, scoped, tag = 'scratch operand']
  #allocation5 [shape = 'f32[1,1]{1,0:T(1,128)S(1)}', space=vmem, size = 0x200, scoped, tag = 'scoped memory for discriminator_forward.1']
  %s0 = inlined_call_operand.vmem [shape: f32[256,128], index: 0, kind: input, shape index: {}]
  %s1 = inlined_call_operand.vmem [shape: f32[384,128], index: 1, kind: input, shape index: {}]
  %s2 = inlined_call_operand.vmem [shape: f32[384,128], index: 2, kind: input, shape index: {}]
  %s3 = inlined_call_operand.vmem [shape: f32[384,128], index: 3, kind: input, shape index: {}]
  %s4 = inlined_call_operand.vmem [shape: f32[3,128], index: 4, kind: input, shape index: {}]
  %s5 = inlined_call_operand.vmem [shape: f32[4,128], index: 5, kind: input, shape index: {}]
  %s6 = inlined_call_operand.<no memory space> [shape: f32[1,1], index: 6, kind: input, shape index: {}]
  %s7 = inlined_call_operand.vmem [shape: f32[1,1,8], index: 7, kind: output, shape index: {}]
  %s8 = sld [smem:[#allocation0]]
  $region38: #{discriminator_forward.1} parent=0
    _
  %s10 = ssub.s32 1, %s8
  %s11 = scalar_select 0, %s10, %s8
  %v12 = vstv %s6
  %13 = vst [vmem:[#allocation5] sm:$0x1] %v12
  // Predicated region
  $region2: #{discriminator_forward.1} parent=0 // pred_check
    _
  $region3: #{discriminator_forward.1} parent=0 // pred_check_branch
    %15 = sbr.rel (0) target = $region5
  $region4: #{discriminator_forward.1} parent=0 // pred_region
    _
  $region5: #{discriminator_forward.1} parent=0 // pred_fallthru
    _
  // Predicated region
  $region6: #{discriminator_forward.1} parent=0 // pred_check
    _
  $region7: #{discriminator_forward.1} parent=0 // pred_check_branch
    %17 = sbr.rel (0) target = $region9
  $region8: #{discriminator_forward.1} parent=0 // pred_region
    _
  $region9: #{discriminator_forward.1} parent=0 // pred_fallthru
    _
  // Predicated region
  $region10: #{discriminator_forward.1} parent=0 // pred_check
    _
  $region11: #{discriminator_forward.1} parent=0 // pred_check_branch
    %19 = sbr.rel (0) target = $region13
  $region12: #{discriminator_forward.1} parent=0 // pred_region
    _
  $region13: #{discriminator_forward.1} parent=0 // pred_fallthru
    _
  // Predicated region
  $region14: #{discriminator_forward.1} parent=0 // pred_check
    _
  $region15: #{discriminator_forward.1} parent=0 // pred_check_branch
    %21 = sbr.rel (0) target = $region17
  $region16: #{discriminator_forward.1} parent=0 // pred_region
    _
  $region17: #{discriminator_forward.1} parent=0 // pred_fallthru
    _
  // Predicated region
  $region18: #{discriminator_forward.1} parent=0 // pred_check
    _
  $region19: #{discriminator_forward.1} parent=0 // pred_check_branch
    %23 = sbr.rel (0) target = $region21
  $region20: #{discriminator_forward.1} parent=0 // pred_region
    _
  $region21: #{discriminator_forward.1} parent=0 // pred_fallthru
    _
  // Predicated region
  $region22: #{discriminator_forward.1} parent=0 // pred_check
    _
  $region23: #{discriminator_forward.1} parent=0 // pred_check_branch
    %25 = sbr.rel (0) target = $region25
  $region24: #{discriminator_forward.1} parent=0 // pred_region
    _
  $region25: #{discriminator_forward.1} parent=0 // pred_fallthru
    _
  // Predicated region
  $region26: #{discriminator_forward.1} parent=0 // pred_check
    _
  $region27: #{discriminator_forward.1} parent=0 // pred_check_branch
    %27 = sbr.rel (0) target = $region29
  $region28: #{discriminator_forward.1} parent=0 // pred_region
    _
  $region29: #{discriminator_forward.1} parent=0 // pred_fallthru
    _
  %v28 = vld [vmem:[%s4] sm:$0x7]
  %v29 = vld [vmem:[%s0] ss:$2 sm:$0xff]
  %s30 = scalar_lea.vmem %s0, 16
  %v31 = vld [vmem:[%s30] ss:$2 sm:$0xff]
  %s32 = scalar_lea.vmem %s0, 32
  %v33 = vld [vmem:[%s32] ss:$2 sm:$0xff]
  %s34 = scalar_lea.vmem %s0, 48
  %v35 = vld [vmem:[%s34] ss:$2 sm:$0xff]
  %s36 = scalar_lea.vmem %s0, 64
  %v37 = vld [vmem:[%s36] ss:$2 sm:$0xff]
  %s38 = scalar_lea.vmem %s0, 80
  %v39 = vld [vmem:[%s38] ss:$2 sm:$0xff]
  %s40 = scalar_lea.vmem %s0, 96
  %v41 = vld [vmem:[%s40] ss:$2 sm:$0xff]
  %s42 = scalar_lea.vmem %s0, 112
  %v43 = vld [vmem:[%s42] ss:$2 sm:$0xff]
  %s44 = scalar_lea.vmem %s0, 128
  %v45 = vld [vmem:[%s44] ss:$2 sm:$0xff]
  %s46 = scalar_lea.vmem %s0, 144
  %v47 = vld [vmem:[%s46] ss:$2 sm:$0xff]
  %s48 = scalar_lea.vmem %s0, 160
  %v49 = vld [vmem:[%s48] ss:$2 sm:$0xff]
  %s50 = scalar_lea.vmem %s0, 176
  %v51 = vld [vmem:[%s50] ss:$2 sm:$0xff]
  %s52 = scalar_lea.vmem %s0, 192
  %v53 = vld [vmem:[%s52] ss:$2 sm:$0xff]
  %s54 = scalar_lea.vmem %s0, 208
  %v55 = vld [vmem:[%s54] ss:$2 sm:$0xff]
  %s56 = scalar_lea.vmem %s0, 224
  %v57 = vld [vmem:[%s56] ss:$2 sm:$0xff]
  %s58 = scalar_lea.vmem %s0, 240
  %v59 = vld [vmem:[%s58] ss:$2 sm:$0xff]
  %s60 = scalar_lea.vmem %s0, 1
  %v61 = vld [vmem:[%s60] ss:$2 sm:$0xff]
  %s62 = scalar_lea.vmem %s0, 17
  %v63 = vld [vmem:[%s62] ss:$2 sm:$0xff]
  %s64 = scalar_lea.vmem %s0, 33
  %v65 = vld [vmem:[%s64] ss:$2 sm:$0xff]
  %s66 = scalar_lea.vmem %s0, 49
  %v67 = vld [vmem:[%s66] ss:$2 sm:$0xff]
  %s68 = scalar_lea.vmem %s0, 65
  %v69 = vld [vmem:[%s68] ss:$2 sm:$0xff]
  %s70 = scalar_lea.vmem %s0, 81
  %v71 = vld [vmem:[%s70] ss:$2 sm:$0xff]
  %s72 = scalar_lea.vmem %s0, 97
  %v73 = vld [vmem:[%s72] ss:$2 sm:$0xff]
  %s74 = scalar_lea.vmem %s0, 113
  %v75 = vld [vmem:[%s74] ss:$2 sm:$0xff]
  %s76 = scalar_lea.vmem %s0, 129
  %v77 = vld [vmem:[%s76] ss:$2 sm:$0xff]
  %s78 = scalar_lea.vmem %s0, 145
  %v79 = vld [vmem:[%s78] ss:$2 sm:$0xff]
  %s80 = scalar_lea.vmem %s0, 161
  %v81 = vld [vmem:[%s80] ss:$2 sm:$0xff]
  %s82 = scalar_lea.vmem %s0, 177
  %v83 = vld [vmem:[%s82] ss:$2 sm:$0xff]
  %s84 = scalar_lea.vmem %s0, 193
  %v85 = vld [vmem:[%s84] ss:$2 sm:$0xff]
  %s86 = scalar_lea.vmem %s0, 209
  %v87 = vld [vmem:[%s86] ss:$2 sm:$0xff]
  %s88 = scalar_lea.vmem %s0, 225
  %v89 = vld [vmem:[%s88] ss:$2 sm:$0xff]
  %s90 = scalar_lea.vmem %s0, 241
  %v91 = vld [vmem:[%s90] ss:$2 sm:$0xff]
  %vm108 = vcmask 1040384
  %v109 = vrot.slane %v61, 7
  %v110 = vrot.slane %v63, 7
  %v111 = vsel %vm108, %v109, %v110
  %v112 = vrot.slane %v65, 7
  %v113 = vsel %vm108, %v110, %v112
  %v114 = vrot.slane %v67, 7
  %v115 = vsel %vm108, %v112, %v114
  %v116 = vrot.slane %v69, 7
  %v117 = vsel %vm108, %v114, %v116
  %v118 = vrot.slane %v71, 7
  %v119 = vsel %vm108, %v116, %v118
  %v120 = vrot.slane %v73, 7
  %v121 = vsel %vm108, %v118, %v120
  %v122 = vrot.slane %v75, 7
  %v123 = vsel %vm108, %v120, %v122
  %v124 = vrot.slane %v77, 7
  %v125 = vsel %vm108, %v122, %v124
  %v126 = vrot.slane %v79, 7
  %v127 = vsel %vm108, %v124, %v126
  %v128 = vrot.slane %v81, 7
  %v129 = vsel %vm108, %v126, %v128
  %v130 = vrot.slane %v83, 7
  %v131 = vsel %vm108, %v128, %v130
  %v132 = vrot.slane %v85, 7
  %v133 = vsel %vm108, %v130, %v132
  %v134 = vrot.slane %v87, 7
  %v135 = vsel %vm108, %v132, %v134
  %v136 = vrot.slane %v89, 7
  %v137 = vsel %vm108, %v134, %v136
  %v138 = vrot.slane %v91, 7
  %v139 = vsel %vm108, %v136, %v138
  %v156 = vsel %vm108, 0.0, %v109
  %v157 = vlaneseq
  %v158 = vshrl.u32 %v157, 7
  %v159 = vadd.s32 %v158, 8
  %v160 = vadd.s32 %v158, 16
  %v161 = vadd.s32 %v158, 24
  %v162 = vadd.s32 %v158, 32
  %v163 = vadd.s32 %v158, 40
  %v164 = vadd.s32 %v158, 48
  %v165 = vadd.s32 %v158, 56
  %v166 = vadd.s32 %v158, 64
  %v167 = vadd.s32 %v158, 72
  %v168 = vadd.s32 %v158, 80
  %v169 = vadd.s32 %v158, 88
  %v170 = vadd.s32 %v158, 96
  %v171 = vadd.s32 %v158, 104
  %v172 = vadd.s32 %v158, 112
  %v173 = vadd.s32 %v158, 120
  %vm174 = vcmp.lt.s32.totalorder %v158, 0
  %v175 = vsub.s32 0, %v158
  %v176 = vsel %vm174, %v175, %v158
  %v177 = vshrl.u32 %v176, 4
  %v178 = vand.u32 %v176, 15
  %v179 = vsub.s32 0, %v178
  %v180 = vsel %vm174, %v179, %v178
  %vm181 = vcmp.lt.s32.totalorder %v159, 0
  %v182 = vsub.s32 0, %v159
  %v183 = vsel %vm181, %v182, %v159
  %v184 = vshrl.u32 %v183, 4
  %v185 = vand.u32 %v183, 15
  %v186 = vsub.s32 0, %v185
  %v187 = vsel %vm181, %v186, %v185
  %vm188 = vcmp.lt.s32.totalorder %v160, 0
  %v189 = vsub.s32 0, %v160
  %v190 = vsel %vm188, %v189, %v160
  %v191 = vshrl.u32 %v190, 4
  %v192 = vand.u32 %v190, 15
  %v193 = vsub.s32 0, %v192
  %v194 = vsel %vm188, %v193, %v192
  %vm195 = vcmp.lt.s32.totalorder %v161, 0
  %v196 = vsub.s32 0, %v161
  %v197 = vsel %vm195, %v196, %v161
  %v198 = vshrl.u32 %v197, 4
  %v199 = vand.u32 %v197, 15
  %v200 = vsub.s32 0, %v199
  %v201 = vsel %vm195, %v200, %v199
  %vm202 = vcmp.lt.s32.totalorder %v162, 0
  %v203 = vsub.s32 0, %v162
  %v204 = vsel %vm202, %v203, %v162
  %v205 = vshrl.u32 %v204, 4
  %v206 = vand.u32 %v204, 15
  %v207 = vsub.s32 0, %v206
  %v208 = vsel %vm202, %v207, %v206
  %vm209 = vcmp.lt.s32.totalorder %v163, 0
  %v210 = vsub.s32 0, %v163
  %v211 = vsel %vm209, %v210, %v163
  %v212 = vshrl.u32 %v211, 4
  %v213 = vand.u32 %v211, 15
  %v214 = vsub.s32 0, %v213
  %v215 = vsel %vm209, %v214, %v213
  %vm216 = vcmp.lt.s32.totalorder %v164, 0
  %v217 = vsub.s32 0, %v164
  %v218 = vsel %vm216, %v217, %v164
  %v219 = vshrl.u32 %v218, 4
  %v220 = vand.u32 %v218, 15
  %v221 = vsub.s32 0, %v220
  %v222 = vsel %vm216, %v221, %v220
  %vm223 = vcmp.lt.s32.totalorder %v165, 0
  %v224 = vsub.s32 0, %v165
  %v225 = vsel %vm223, %v224, %v165
  %v226 = vshrl.u32 %v225, 4
  %v227 = vand.u32 %v225, 15
  %v228 = vsub.s32 0, %v227
  %v229 = vsel %vm223, %v228, %v227
  %vm230 = vcmp.lt.s32.totalorder %v166, 0
  %v231 = vsub.s32 0, %v166
  %v232 = vsel %vm230, %v231, %v166
  %v233 = vshrl.u32 %v232, 4
  %v234 = vand.u32 %v232, 15
  %v235 = vsub.s32 0, %v234
  %v236 = vsel %vm230, %v235, %v234
  %vm237 = vcmp.lt.s32.totalorder %v167, 0
  %v238 = vsub.s32 0, %v167
  %v239 = vsel %vm237, %v238, %v167
  %v240 = vshrl.u32 %v239, 4
  %v241 = vand.u32 %v239, 15
  %v242 = vsub.s32 0, %v241
  %v243 = vsel %vm237, %v242, %v241
  %vm244 = vcmp.lt.s32.totalorder %v168, 0
  %v245 = vsub.s32 0, %v168
  %v246 = vsel %vm244, %v245, %v168
  %v247 = vshrl.u32 %v246, 4
  %v248 = vand.u32 %v246, 15
  %v249 = vsub.s32 0, %v248
  %v250 = vsel %vm244, %v249, %v248
  %vm251 = vcmp.lt.s32.totalorder %v169, 0
  %v252 = vsub.s32 0, %v169
  %v253 = vsel %vm251, %v252, %v169
  %v254 = vshrl.u32 %v253, 4
  %v255 = vand.u32 %v253, 15
  %v256 = vsub.s32 0, %v255
  %v257 = vsel %vm251, %v256, %v255
  %vm258 = vcmp.lt.s32.totalorder %v170, 0
  %v259 = vsub.s32 0, %v170
  %v260 = vsel %vm258, %v259, %v170
  %v261 = vshrl.u32 %v260, 4
  %v262 = vand.u32 %v260, 15
  %v263 = vsub.s32 0, %v262
  %v264 = vsel %vm258, %v263, %v262
  %vm265 = vcmp.lt.s32.totalorder %v171, 0
  %v266 = vsub.s32 0, %v171
  %v267 = vsel %vm265, %v266, %v171
  %v268 = vshrl.u32 %v267, 4
  %v269 = vand.u32 %v267, 15
  %v270 = vsub.s32 0, %v269
  %v271 = vsel %vm265, %v270, %v269
  %vm272 = vcmp.lt.s32.totalorder %v172, 0
  %v273 = vsub.s32 0, %v172
  %v274 = vsel %vm272, %v273, %v172
  %v275 = vshrl.u32 %v274, 4
  %v276 = vand.u32 %v274, 15
  %v277 = vsub.s32 0, %v276
  %v278 = vsel %vm272, %v277, %v276
  %vm279 = vcmp.lt.s32.totalorder %v173, 0
  %v280 = vsub.s32 0, %v173
  %v281 = vsel %vm279, %v280, %v173
  %v282 = vshrl.u32 %v281, 4
  %v283 = vand.u32 %v281, 15
  %v284 = vsub.s32 0, %v283
  %v285 = vsel %vm279, %v284, %v283
  %vm286 = vcmp.ne.s32.totalorder %v180, 0
  %vm287 = vcmp.ne.s32.totalorder %v187, 0
  %vm288 = vcmp.ne.s32.totalorder %v194, 0
  %vm289 = vcmp.ne.s32.totalorder %v201, 0
  %vm290 = vcmp.ne.s32.totalorder %v208, 0
  %vm291 = vcmp.ne.s32.totalorder %v215, 0
  %vm292 = vcmp.ne.s32.totalorder %v222, 0
  %vm293 = vcmp.ne.s32.totalorder %v229, 0
  %vm294 = vcmp.ne.s32.totalorder %v236, 0
  %vm295 = vcmp.ne.s32.totalorder %v243, 0
  %vm296 = vcmp.ne.s32.totalorder %v250, 0
  %vm297 = vcmp.ne.s32.totalorder %v257, 0
  %vm298 = vcmp.ne.s32.totalorder %v264, 0
  %vm299 = vcmp.ne.s32.totalorder %v271, 0
  %vm300 = vcmp.ne.s32.totalorder %v278, 0
  %vm301 = vcmp.ne.s32.totalorder %v285, 0
  %vm302 = vcmp.lt.s32.totalorder %v180, 0
  %vm303 = vcmp.lt.s32.totalorder %v187, 0
  %vm304 = vcmp.lt.s32.totalorder %v194, 0
  %vm305 = vcmp.lt.s32.totalorder %v201, 0
  %vm306 = vcmp.lt.s32.totalorder %v208, 0
  %vm307 = vcmp.lt.s32.totalorder %v215, 0
  %vm308 = vcmp.lt.s32.totalorder %v222, 0
  %vm309 = vcmp.lt.s32.totalorder %v229, 0
  %vm310 = vcmp.lt.s32.totalorder %v236, 0
  %vm311 = vcmp.lt.s32.totalorder %v243, 0
  %vm312 = vcmp.lt.s32.totalorder %v250, 0
  %vm313 = vcmp.lt.s32.totalorder %v257, 0
  %vm314 = vcmp.lt.s32.totalorder %v264, 0
  %vm315 = vcmp.lt.s32.totalorder %v271, 0
  %vm316 = vcmp.lt.s32.totalorder %v278, 0
  %vm317 = vcmp.lt.s32.totalorder %v285, 0
  %vm318 = vmand %vm302, %vm286
  %vm319 = vmand %vm303, %vm287
  %vm320 = vmand %vm304, %vm288
  %vm321 = vmand %vm305, %vm289
  %vm322 = vmand %vm306, %vm290
  %vm323 = vmand %vm307, %vm291
  %vm324 = vmand %vm308, %vm292
  %vm325 = vmand %vm309, %vm293
  %vm326 = vmand %vm310, %vm294
  %vm327 = vmand %vm311, %vm295
  %vm328 = vmand %vm312, %vm296
  %vm329 = vmand %vm313, %vm297
  %vm330 = vmand %vm314, %vm298
  %vm331 = vmand %vm315, %vm299
  %vm332 = vmand %vm316, %vm300
  %vm333 = vmand %vm317, %vm301
  %v334 = vadd.s32 %v180, 16
  %v335 = vadd.s32 %v187, 16
  %v336 = vadd.s32 %v194, 16
  %v337 = vadd.s32 %v201, 16
  %v338 = vadd.s32 %v208, 16
  %v339 = vadd.s32 %v215, 16
  %v340 = vadd.s32 %v222, 16
  %v341 = vadd.s32 %v229, 16
  %v342 = vadd.s32 %v236, 16
  %v343 = vadd.s32 %v243, 16
  %v344 = vadd.s32 %v250, 16
  %v345 = vadd.s32 %v257, 16
  %v346 = vadd.s32 %v264, 16
  %v347 = vadd.s32 %v271, 16
  %v348 = vadd.s32 %v278, 16
  %v349 = vadd.s32 %v285, 16
  %v350 = vsel %vm318, %v334, %v180
  %v351 = vsel %vm319, %v335, %v187
  %v352 = vsel %vm320, %v336, %v194
  %v353 = vsel %vm321, %v337, %v201
  %v354 = vsel %vm322, %v338, %v208
  %v355 = vsel %vm323, %v339, %v215
  %v356 = vsel %vm324, %v340, %v222
  %v357 = vsel %vm325, %v341, %v229
  %v358 = vsel %vm326, %v342, %v236
  %v359 = vsel %vm327, %v343, %v243
  %v360 = vsel %vm328, %v344, %v250
  %v361 = vsel %vm329, %v345, %v257
  %v362 = vsel %vm330, %v346, %v264
  %v363 = vsel %vm331, %v347, %v271
  %v364 = vsel %vm332, %v348, %v278
  %v365 = vsel %vm333, %v349, %v285
  %vm366 = vcmp.eq.s32.totalorder %v350, 0
  %vm367 = vcmp.eq.s32.totalorder %v351, 0
  %vm368 = vcmp.eq.s32.totalorder %v352, 0
  %vm369 = vcmp.eq.s32.totalorder %v353, 0
  %vm370 = vcmp.eq.s32.totalorder %v354, 0
  %vm371 = vcmp.eq.s32.totalorder %v355, 0
  %vm372 = vcmp.eq.s32.totalorder %v356, 0
  %vm373 = vcmp.eq.s32.totalorder %v357, 0
  %vm374 = vcmp.eq.s32.totalorder %v358, 0
  %vm375 = vcmp.eq.s32.totalorder %v359, 0
  %vm376 = vcmp.eq.s32.totalorder %v360, 0
  %vm377 = vcmp.eq.s32.totalorder %v361, 0
  %vm378 = vcmp.eq.s32.totalorder %v362, 0
  %vm379 = vcmp.eq.s32.totalorder %v363, 0
  %vm380 = vcmp.eq.s32.totalorder %v364, 0
  %vm381 = vcmp.eq.s32.totalorder %v365, 0
  %v382 = vsel %vm366, 0.0, %v156
  %v383 = vsel %vm367, 0.0, %v111
  %v384 = vsel %vm368, 0.0, %v113
  %v385 = vsel %vm369, 0.0, %v115
  %v386 = vsel %vm370, 0.0, %v117
  %v387 = vsel %vm371, 0.0, %v119
  %v388 = vsel %vm372, 0.0, %v121
  %v389 = vsel %vm373, 0.0, %v123
  %v390 = vsel %vm374, 0.0, %v125
  %v391 = vsel %vm375, 0.0, %v127
  %v392 = vsel %vm376, 0.0, %v129
  %v393 = vsel %vm377, 0.0, %v131
  %v394 = vsel %vm378, 0.0, %v133
  %v395 = vsel %vm379, 0.0, %v135
  %v396 = vsel %vm380, 0.0, %v137
  %v397 = vsel %vm381, 0.0, %v139
  %v398 = vld [vmem:[%s1] sm:$0xff]
  %v399 = vld [vmem:[%s1 + $0x8] sm:$0xff]
  %v400 = vld [vmem:[%s1 + $0x10] sm:$0xff]
  %v401 = vld [vmem:[%s1 + $0x18] sm:$0xff]
  %v402 = vld [vmem:[%s1 + $0x20] sm:$0xff]
  %v403 = vld [vmem:[%s1 + $0x28] sm:$0xff]
  %v404 = vld [vmem:[%s1 + $0x30] sm:$0xff]
  %v405 = vld [vmem:[%s1 + $0x38] sm:$0xff]
  %v406 = vld [vmem:[%s1 + $0x40] sm:$0xff]
  %v407 = vld [vmem:[%s1 + $0x48] sm:$0xff]
  %v408 = vld [vmem:[%s1 + $0x50] sm:$0xff]
  %v409 = vld [vmem:[%s1 + $0x58] sm:$0xff]
  %v410 = vld [vmem:[%s1 + $0x60] sm:$0xff]
  %v411 = vld [vmem:[%s1 + $0x68] sm:$0xff]
  %v412 = vld [vmem:[%s1 + $0x70] sm:$0xff]
  %v413 = vld [vmem:[%s1 + $0x78] sm:$0xff]
  %v414 = vld [vmem:[%s1 + $0x80] sm:$0xff]
  %v415 = vld [vmem:[%s1 + $0x88] sm:$0xff]
  %v416 = vld [vmem:[%s1 + $0x90] sm:$0xff]
  %v417 = vld [vmem:[%s1 + $0x98] sm:$0xff]
  %v418 = vld [vmem:[%s1 + $0xa0] sm:$0xff]
  %v419 = vld [vmem:[%s1 + $0xa8] sm:$0xff]
  %v420 = vld [vmem:[%s1 + $0xb0] sm:$0xff]
  %v421 = vld [vmem:[%s1 + $0xb8] sm:$0xff]
  %v422 = vld [vmem:[%s1 + $0xc0] sm:$0xff]
  %v423 = vld [vmem:[%s1 + $0xc8] sm:$0xff]
  %v424 = vld [vmem:[%s1 + $0xd0] sm:$0xff]
  %v425 = vld [vmem:[%s1 + $0xd8] sm:$0xff]
  %v426 = vld [vmem:[%s1 + $0xe0] sm:$0xff]
  %v427 = vld [vmem:[%s1 + $0xe8] sm:$0xff]
  %v428 = vld [vmem:[%s1 + $0xf0] sm:$0xff]
  %v429 = vld [vmem:[%s1 + $0xf8] sm:$0xff]
  %v430 = vld [vmem:[%s1 + $0x100] sm:$0xff]
  %v431 = vld [vmem:[%s1 + $0x108] sm:$0xff]
  %v432 = vld [vmem:[%s1 + $0x110] sm:$0xff]
  %v433 = vld [vmem:[%s1 + $0x118] sm:$0xff]
  %v434 = vld [vmem:[%s1 + $0x120] sm:$0xff]
  %v435 = vld [vmem:[%s1 + $0x128] sm:$0xff]
  %v436 = vld [vmem:[%s1 + $0x130] sm:$0xff]
  %v437 = vld [vmem:[%s1 + $0x138] sm:$0xff]
  %v438 = vld [vmem:[%s1 + $0x140] sm:$0xff]
  %v439 = vld [vmem:[%s1 + $0x148] sm:$0xff]
  %v440 = vld [vmem:[%s1 + $0x150] sm:$0xff]
  %v441 = vld [vmem:[%s1 + $0x158] sm:$0xff]
  %v442 = vld [vmem:[%s1 + $0x160] sm:$0xff]
  %v443 = vld [vmem:[%s1 + $0x168] sm:$0xff]
  %v444 = vld [vmem:[%s1 + $0x170] sm:$0xff]
  %v445 = vld [vmem:[%s1 + $0x178] sm:$0xff]
  %v446 = vlaneseq
  %v447 = vshrl.u32 %v446, 7
  %v448 = vsub.s32 0, %v447
  %v449 = vrot.slane %v28, %v448
  %450 = vmatprep.subr.mxu0 0.0
  %451 = vmatpush1.msra.mxu0 %v413
  %452 = vmatprep.subr.mxu0 0.0
  %453 = vmatpush1.msra.mxu0 %v412
  %454 = vmatprep.subr.mxu0 0.0
  %455 = vmatpush1.msra.mxu0 %v411
  %456 = vmatprep.subr.mxu0 0.0
  %457 = vmatpush1.msra.mxu0 %v410
  %458 = vmatprep.subr.mxu0 0.0
  %459 = vmatpush1.msra.mxu0 %v409
  %460 = vmatprep.subr.mxu0 0.0
  %461 = vmatpush1.msra.mxu0 %v408
  %462 = vmatprep.subr.mxu0 0.0
  %463 = vmatpush1.msra.mxu0 %v407
  %464 = vmatprep.subr.mxu0 0.0
  %465 = vmatpush1.msra.mxu0 %v406
  %466 = vmatprep.subr.mxu0 0.0
  %467 = vmatpush1.msra.mxu0 %v405
  %468 = vmatprep.subr.mxu0 0.0
  %469 = vmatpush1.msra.mxu0 %v404
  %470 = vmatprep.subr.mxu0 0.0
  %471 = vmatpush1.msra.mxu0 %v403
  %472 = vmatprep.subr.mxu0 0.0
  %473 = vmatpush1.msra.mxu0 %v402
  %474 = vmatprep.subr.mxu0 0.0
  %475 = vmatpush1.msra.mxu0 %v401
  %476 = vmatprep.subr.mxu0 0.0
  %477 = vmatpush1.msra.mxu0 %v400
  %478 = vmatprep.subr.mxu0 0.0
  %479 = vmatpush1.msra.mxu0 %v399
  %480 = vmatprep.subr.mxu0 0.0
  %481 = vmatpush1.msra.mxu0 %v398
  %482 = vmatprep.subr.mxu0 0.0
  %483 = vmatpush2.msra.mxu0 %v429
  %484 = vmatprep.subr.mxu0 0.0
  %485 = vmatpush2.msra.mxu0 %v428
  %486 = vmatprep.subr.mxu0 0.0
  %487 = vmatpush2.msra.mxu0 %v427
  %488 = vmatprep.subr.mxu0 0.0
  %489 = vmatpush2.msra.mxu0 %v426
  %490 = vmatprep.subr.mxu0 0.0
  %491 = vmatpush2.msra.mxu0 %v425
  %492 = vmatprep.subr.mxu0 0.0
  %493 = vmatpush2.msra.mxu0 %v424
  %494 = vmatprep.subr.mxu0 0.0
  %495 = vmatpush2.msra.mxu0 %v423
  %496 = vmatprep.subr.mxu0 0.0
  %497 = vmatpush2.msra.mxu0 %v422
  %498 = vmatprep.subr.mxu0 0.0
  %499 = vmatpush2.msra.mxu0 %v421
  %500 = vmatprep.subr.mxu0 0.0
  %501 = vmatpush2.msra.mxu0 %v420
  %502 = vmatprep.subr.mxu0 0.0
  %503 = vmatpush2.msra.mxu0 %v419
  %504 = vmatprep.subr.mxu0 0.0
  %505 = vmatpush2.msra.mxu0 %v418
  %506 = vmatprep.subr.mxu0 0.0
  %507 = vmatpush2.msra.mxu0 %v417
  %508 = vmatprep.subr.mxu0 0.0
  %509 = vmatpush2.msra.mxu0 %v416
  %510 = vmatprep.subr.mxu0 0.0
  %511 = vmatpush2.msra.mxu0 %v415
  %512 = vmatprep.subr.mxu0 0.0
  %513 = vmatpush2.msra.mxu0 %v414
  %514 = vmatprep.mubr.f32.mxu0 %v29
  %515 = vmatmul.mubr.f32.gmra.mxu0 %v382
  %v516 = vpop.f32.mrf.mxu0
  %v517 = vadd.f32 %v449, %v516
  %v518 = vpop.f32.mrf.mxu0
  %519 = vmatprep.mubr.f32.mxu0 %v31
  %520 = vmatmul.mubr.f32.gmra.mxu0 %v383
  %v521 = vpop.f32.mrf.mxu0
  %v522 = vadd.f32 %v449, %v521
  %v523 = vpop.f32.mrf.mxu0
  %524 = vmatprep.mubr.f32.mxu0 %v33
  %525 = vmatmul.mubr.f32.gmra.mxu0 %v384
  %v526 = vpop.f32.mrf.mxu0
  %v527 = vadd.f32 %v449, %v526
  %v528 = vpop.f32.mrf.mxu0
  %529 = vmatprep.mubr.f32.mxu0 %v35
  %530 = vmatmul.mubr.f32.gmra.mxu0 %v385
  %v531 = vpop.f32.mrf.mxu0
  %v532 = vadd.f32 %v449, %v531
  %v533 = vpop.f32.mrf.mxu0
  %534 = vmatprep.mubr.f32.mxu0 %v37
  %535 = vmatmul.mubr.f32.gmra.mxu0 %v386
  %v536 = vpop.f32.mrf.mxu0
  %v537 = vadd.f32 %v449, %v536
  %v538 = vpop.f32.mrf.mxu0
  %539 = vmatprep.mubr.f32.mxu0 %v39
  %540 = vmatmul.mubr.f32.gmra.mxu0 %v387
  %v541 = vpop.f32.mrf.mxu0
  %v542 = vadd.f32 %v449, %v541
  %v543 = vpop.f32.mrf.mxu0
  %544 = vmatprep.mubr.f32.mxu0 %v41
  %545 = vmatmul.mubr.f32.gmra.mxu0 %v388
  %v546 = vpop.f32.mrf.mxu0
  %v547 = vadd.f32 %v449, %v546
  %v548 = vpop.f32.mrf.mxu0
  %549 = vmatprep.mubr.f32.mxu0 %v43
  %550 = vmatmul.mubr.f32.gmra.mxu0 %v389
  %v551 = vpop.f32.mrf.mxu0
  %v552 = vadd.f32 %v449, %v551
  %v553 = vpop.f32.mrf.mxu0
  %554 = vmatprep.mubr.f32.mxu0 %v45
  %555 = vmatmul.mubr.f32.gmra.mxu0 %v390
  %v556 = vpop.f32.mrf.mxu0
  %v557 = vadd.f32 %v449, %v556
  %v558 = vpop.f32.mrf.mxu0
  %559 = vmatprep.mubr.f32.mxu0 %v47
  %560 = vmatmul.mubr.f32.gmra.mxu0 %v391
  %v561 = vpop.f32.mrf.mxu0
  %v562 = vadd.f32 %v449, %v561
  %v563 = vpop.f32.mrf.mxu0
  %564 = vmatprep.mubr.f32.mxu0 %v49
  %565 = vmatmul.mubr.f32.gmra.mxu0 %v392
  %v566 = vpop.f32.mrf.mxu0
  %v567 = vadd.f32 %v449, %v566
  %v568 = vpop.f32.mrf.mxu0
  %569 = vmatprep.mubr.f32.mxu0 %v51
  %570 = vmatmul.mubr.f32.gmra.mxu0 %v393
  %v571 = vpop.f32.mrf.mxu0
  %v572 = vadd.f32 %v449, %v571
  %v573 = vpop.f32.mrf.mxu0
  %574 = vmatprep.mubr.f32.mxu0 %v53
  %575 = vmatmul.mubr.f32.gmra.mxu0 %v394
  %v576 = vpop.f32.mrf.mxu0
  %v577 = vadd.f32 %v449, %v576
  %v578 = vpop.f32.mrf.mxu0
  %579 = vmatprep.mubr.f32.mxu0 %v55
  %580 = vmatmul.mubr.f32.gmra.mxu0 %v395
  %v581 = vpop.f32.mrf.mxu0
  %v582 = vadd.f32 %v449, %v581
  %v583 = vpop.f32.mrf.mxu0
  %584 = vmatprep.mubr.f32.mxu0 %v57
  %585 = vmatmul.mubr.f32.gmra.mxu0 %v396
  %v586 = vpop.f32.mrf.mxu0
  %v587 = vadd.f32 %v449, %v586
  %v588 = vpop.f32.mrf.mxu0
  %589 = vmatprep.mubr.f32.mxu0 %v59
  %590 = vmatmul.mubr.f32.gmra.mxu0 %v397
  %v591 = vpop.f32.mrf.mxu0
  %v592 = vadd.f32 %v449, %v591
  %v593 = vpop.f32.mrf.mxu0
  %594 = vdwg.mxu0
  %595 = vmatprep.subr.mxu0 0.0
  %596 = vmatpush1.msra.mxu0 %v445
  %597 = vmatprep.subr.mxu0 0.0
  %598 = vmatpush1.msra.mxu0 %v444
  %599 = vmatprep.subr.mxu0 0.0
  %600 = vmatpush1.msra.mxu0 %v443
  %601 = vmatprep.subr.mxu0 0.0
  %602 = vmatpush1.msra.mxu0 %v442
  %603 = vmatprep.subr.mxu0 0.0
  %604 = vmatpush1.msra.mxu0 %v441
  %605 = vmatprep.subr.mxu0 0.0
  %606 = vmatpush1.msra.mxu0 %v440
  %607 = vmatprep.subr.mxu0 0.0
  %608 = vmatpush1.msra.mxu0 %v439
  %609 = vmatprep.subr.mxu0 0.0
  %610 = vmatpush1.msra.mxu0 %v438
  %611 = vmatprep.subr.mxu0 0.0
  %612 = vmatpush1.msra.mxu0 %v437
  %613 = vmatprep.subr.mxu0 0.0
  %614 = vmatpush1.msra.mxu0 %v436
  %615 = vmatprep.subr.mxu0 0.0
  %616 = vmatpush1.msra.mxu0 %v435
  %617 = vmatprep.subr.mxu0 0.0
  %618 = vmatpush1.msra.mxu0 %v434
  %619 = vmatprep.subr.mxu0 0.0
  %620 = vmatpush1.msra.mxu0 %v433
  %621 = vmatprep.subr.mxu0 0.0
  %622 = vmatpush1.msra.mxu0 %v432
  %623 = vmatprep.subr.mxu0 0.0
  %624 = vmatpush1.msra.mxu0 %v431
  %625 = vmatprep.subr.mxu0 0.0
  %626 = vmatpush1.msra.mxu0 %v430
  %627 = vmatprep.subr.mxu0 0.0
  %628 = vmatpush2.msra.mxu0 0.0
  %629 = vmatprep.subr.mxu0 0.0
  %630 = vmatpush2.msra.mxu0 0.0
  %631 = vmatprep.subr.mxu0 0.0
  %632 = vmatpush2.msra.mxu0 0.0
  %633 = vmatprep.subr.mxu0 0.0
  %634 = vmatpush2.msra.mxu0 0.0
  %635 = vmatprep.subr.mxu0 0.0
  %636 = vmatpush2.msra.mxu0 0.0
  %637 = vmatprep.subr.mxu0 0.0
  %638 = vmatpush2.msra.mxu0 0.0
  %639 = vmatprep.subr.mxu0 0.0
  %640 = vmatpush2.msra.mxu0 0.0
  %641 = vmatprep.subr.mxu0 0.0
  %642 = vmatpush2.msra.mxu0 0.0
  %643 = vmatprep.subr.mxu0 0.0
  %644 = vmatpush2.msra.mxu0 0.0
  %645 = vmatprep.subr.mxu0 0.0
  %646 = vmatpush2.msra.mxu0 0.0
  %647 = vmatprep.subr.mxu0 0.0
  %648 = vmatpush2.msra.mxu0 0.0
  %649 = vmatprep.subr.mxu0 0.0
  %650 = vmatpush2.msra.mxu0 0.0
  %651 = vmatprep.subr.mxu0 0.0
  %652 = vmatpush2.msra.mxu0 0.0
  %653 = vmatprep.subr.mxu0 0.0
  %654 = vmatpush2.msra.mxu0 0.0
  %655 = vmatprep.subr.mxu0 0.0
  %656 = vmatpush2.msra.mxu0 0.0
  %657 = vmatprep.subr.mxu0 0.0
  %658 = vmatpush2.msra.mxu0 0.0
  %659 = vmatprep.mubr.f32.mxu0 0.0
  %660 = vmatmul.mubr.f32.gmra.mxu0 %v61
  %v661 = vpop.f32.mrf.mxu0
  %v662 = vadd.f32 %v517, %v661
  %v663 = vpop.f32.mrf.mxu0
  %664 = vmatprep.mubr.f32.mxu0 0.0
  %665 = vmatmul.mubr.f32.gmra.mxu0 %v63
  %v666 = vpop.f32.mrf.mxu0
  %v667 = vadd.f32 %v522, %v666
  %v668 = vpop.f32.mrf.mxu0
  %669 = vmatprep.mubr.f32.mxu0 0.0
  %670 = vmatmul.mubr.f32.gmra.mxu0 %v65
  %v671 = vpop.f32.mrf.mxu0
  %v672 = vadd.f32 %v527, %v671
  %v673 = vpop.f32.mrf.mxu0
  %674 = vmatprep.mubr.f32.mxu0 0.0
  %675 = vmatmul.mubr.f32.gmra.mxu0 %v67
  %v676 = vpop.f32.mrf.mxu0
  %v677 = vadd.f32 %v532, %v676
  %v678 = vpop.f32.mrf.mxu0
  %679 = vmatprep.mubr.f32.mxu0 0.0
  %680 = vmatmul.mubr.f32.gmra.mxu0 %v69
  %v681 = vpop.f32.mrf.mxu0
  %v682 = vadd.f32 %v537, %v681
  %v683 = vpop.f32.mrf.mxu0
  %684 = vmatprep.mubr.f32.mxu0 0.0
  %685 = vmatmul.mubr.f32.gmra.mxu0 %v71
  %v686 = vpop.f32.mrf.mxu0
  %v687 = vadd.f32 %v542, %v686
  %v688 = vpop.f32.mrf.mxu0
  %689 = vmatprep.mubr.f32.mxu0 0.0
  %690 = vmatmul.mubr.f32.gmra.mxu0 %v73
  %v691 = vpop.f32.mrf.mxu0
  %v692 = vadd.f32 %v547, %v691
  %v693 = vpop.f32.mrf.mxu0
  %694 = vmatprep.mubr.f32.mxu0 0.0
  %695 = vmatmul.mubr.f32.gmra.mxu0 %v75
  %v696 = vpop.f32.mrf.mxu0
  %v697 = vadd.f32 %v552, %v696
  %v698 = vpop.f32.mrf.mxu0
  %699 = vmatprep.mubr.f32.mxu0 0.0
  %700 = vmatmul.mubr.f32.gmra.mxu0 %v77
  %v701 = vpop.f32.mrf.mxu0
  %v702 = vadd.f32 %v557, %v701
  %v703 = vpop.f32.mrf.mxu0
  %704 = vmatprep.mubr.f32.mxu0 0.0
  %705 = vmatmul.mubr.f32.gmra.mxu0 %v79
  %v706 = vpop.f32.mrf.mxu0
  %v707 = vadd.f32 %v562, %v706
  %v708 = vpop.f32.mrf.mxu0
  %709 = vmatprep.mubr.f32.mxu0 0.0
  %710 = vmatmul.mubr.f32.gmra.mxu0 %v81
  %v711 = vpop.f32.mrf.mxu0
  %v712 = vadd.f32 %v567, %v711
  %v713 = vpop.f32.mrf.mxu0
  %714 = vmatprep.mubr.f32.mxu0 0.0
  %715 = vmatmul.mubr.f32.gmra.mxu0 %v83
  %v716 = vpop.f32.mrf.mxu0
  %v717 = vadd.f32 %v572, %v716
  %v718 = vpop.f32.mrf.mxu0
  %719 = vmatprep.mubr.f32.mxu0 0.0
  %720 = vmatmul.mubr.f32.gmra.mxu0 %v85
  %v721 = vpop.f32.mrf.mxu0
  %v722 = vadd.f32 %v577, %v721
  %v723 = vpop.f32.mrf.mxu0
  %724 = vmatprep.mubr.f32.mxu0 0.0
  %725 = vmatmul.mubr.f32.gmra.mxu0 %v87
  %v726 = vpop.f32.mrf.mxu0
  %v727 = vadd.f32 %v582, %v726
  %v728 = vpop.f32.mrf.mxu0
  %729 = vmatprep.mubr.f32.mxu0 0.0
  %730 = vmatmul.mubr.f32.gmra.mxu0 %v89
  %v731 = vpop.f32.mrf.mxu0
  %v732 = vadd.f32 %v587, %v731
  %v733 = vpop.f32.mrf.mxu0
  %734 = vmatprep.mubr.f32.mxu0 0.0
  %735 = vmatmul.mubr.f32.gmra.mxu0 %v91
  %v736 = vpop.f32.mrf.mxu0
  %v737 = vadd.f32 %v592, %v736
  %v738 = vpop.f32.mrf.mxu0
  %739 = vdwg.mxu0
  %vm740 = vcmp.gt.f32.partialorder %v662, 0.0
  %vm741 = vcmp.gt.f32.partialorder %v667, 0.0
  %vm742 = vcmp.gt.f32.partialorder %v672, 0.0
  %vm743 = vcmp.gt.f32.partialorder %v677, 0.0
  %vm744 = vcmp.gt.f32.partialorder %v682, 0.0
  %vm745 = vcmp.gt.f32.partialorder %v687, 0.0
  %vm746 = vcmp.gt.f32.partialorder %v692, 0.0
  %vm747 = vcmp.gt.f32.partialorder %v697, 0.0
  %vm748 = vcmp.gt.f32.partialorder %v702, 0.0
  %vm749 = vcmp.gt.f32.partialorder %v707, 0.0
  %vm750 = vcmp.gt.f32.partialorder %v712, 0.0
  %vm751 = vcmp.gt.f32.partialorder %v717, 0.0
  %vm752 = vcmp.gt.f32.partialorder %v722, 0.0
  %vm753 = vcmp.gt.f32.partialorder %v727, 0.0
  %vm754 = vcmp.gt.f32.partialorder %v732, 0.0
  %vm755 = vcmp.gt.f32.partialorder %v737, 0.0
  %v756 = vmul.f32 %v662, 0.01
  %v757 = vmul.f32 %v667, 0.01
  %v758 = vmul.f32 %v672, 0.01
  %v759 = vmul.f32 %v677, 0.01
  %v760 = vmul.f32 %v682, 0.01
  %v761 = vmul.f32 %v687, 0.01
  %v762 = vmul.f32 %v692, 0.01
  %v763 = vmul.f32 %v697, 0.01
  %v764 = vmul.f32 %v702, 0.01
  %v765 = vmul.f32 %v707, 0.01
  %v766 = vmul.f32 %v712, 0.01
  %v767 = vmul.f32 %v717, 0.01
  %v768 = vmul.f32 %v722, 0.01
  %v769 = vmul.f32 %v727, 0.01
  %v770 = vmul.f32 %v732, 0.01
  %v771 = vmul.f32 %v737, 0.01
  %v772 = vsel %vm740, %v662, %v756
  %v773 = vsel %vm741, %v667, %v757
  %v774 = vsel %vm742, %v672, %v758
  %v775 = vsel %vm743, %v677, %v759
  %v776 = vsel %vm744, %v682, %v760
  %v777 = vsel %vm745, %v687, %v761
  %v778 = vsel %vm746, %v692, %v762
  %v779 = vsel %vm747, %v697, %v763
  %v780 = vsel %vm748, %v702, %v764
  %v781 = vsel %vm749, %v707, %v765
  %v782 = vsel %vm750, %v712, %v766
  %v783 = vsel %vm751, %v717, %v767
  %v784 = vsel %vm752, %v722, %v768
  %v785 = vsel %vm753, %v727, %v769
  %v786 = vsel %vm754, %v732, %v770
  %v787 = vsel %vm755, %v737, %v771
  %788 = vst [vmem:[#allocation2] sm:$0xff] %v772
  %789 = vst [vmem:[#allocation2 + $0x8] sm:$0xff] %v773
  %790 = vst [vmem:[#allocation2 + $0x10] sm:$0xff] %v774
  %791 = vst [vmem:[#allocation2 + $0x18] sm:$0xff] %v775
  %792 = vst [vmem:[#allocation2 + $0x20] sm:$0xff] %v776
  %793 = vst [vmem:[#allocation2 + $0x28] sm:$0xff] %v777
  %794 = vst [vmem:[#allocation2 + $0x30] sm:$0xff] %v778
  %795 = vst [vmem:[#allocation2 + $0x38] sm:$0xff] %v779
  %796 = vst [vmem:[#allocation2 + $0x40] sm:$0xff] %v780
  %797 = vst [vmem:[#allocation2 + $0x48] sm:$0xff] %v781
  %798 = vst [vmem:[#allocation2 + $0x50] sm:$0xff] %v782
  %799 = vst [vmem:[#allocation2 + $0x58] sm:$0xff] %v783
  %800 = vst [vmem:[#allocation2 + $0x60] sm:$0xff] %v784
  %801 = vst [vmem:[#allocation2 + $0x68] sm:$0xff] %v785
  %802 = vst [vmem:[#allocation2 + $0x70] sm:$0xff] %v786
  %803 = vst [vmem:[#allocation2 + $0x78] sm:$0xff] %v787
  %v804 = vld [vmem:[#allocation2] ss:$2 sm:$0xff]
  %s805 = scalar_lea.vmem [#allocation2], 16
  %v806 = vld [vmem:[%s805] ss:$2 sm:$0xff]
  %s807 = scalar_lea.vmem [#allocation2], 32
  %v808 = vld [vmem:[%s807] ss:$2 sm:$0xff]
  %s809 = scalar_lea.vmem [#allocation2], 48
  %v810 = vld [vmem:[%s809] ss:$2 sm:$0xff]
  %s811 = scalar_lea.vmem [#allocation2], 64
  %v812 = vld [vmem:[%s811] ss:$2 sm:$0xff]
  %s813 = scalar_lea.vmem [#allocation2], 80
  %v814 = vld [vmem:[%s813] ss:$2 sm:$0xff]
  %s815 = scalar_lea.vmem [#allocation2], 96
  %v816 = vld [vmem:[%s815] ss:$2 sm:$0xff]
  %s817 = scalar_lea.vmem [#allocation2], 112
  %v818 = vld [vmem:[%s817] ss:$2 sm:$0xff]
  %s819 = scalar_lea.vmem [#allocation2], 1
  %v820 = vld [vmem:[%s819] ss:$2 sm:$0xff]
  %s821 = scalar_lea.vmem [#allocation2], 17
  %v822 = vld [vmem:[%s821] ss:$2 sm:$0xff]
  %s823 = scalar_lea.vmem [#allocation2], 33
  %v824 = vld [vmem:[%s823] ss:$2 sm:$0xff]
  %s825 = scalar_lea.vmem [#allocation2], 49
  %v826 = vld [vmem:[%s825] ss:$2 sm:$0xff]
  %s827 = scalar_lea.vmem [#allocation2], 65
  %v828 = vld [vmem:[%s827] ss:$2 sm:$0xff]
  %s829 = scalar_lea.vmem [#allocation2], 81
  %v830 = vld [vmem:[%s829] ss:$2 sm:$0xff]
  %s831 = scalar_lea.vmem [#allocation2], 97
  %v832 = vld [vmem:[%s831] ss:$2 sm:$0xff]
  %s833 = scalar_lea.vmem [#allocation2], 113
  %v834 = vld [vmem:[%s833] ss:$2 sm:$0xff]
  %v843 = vrot.slane %v820, 7
  %v844 = vrot.slane %v822, 7
  %v845 = vsel %vm108, %v843, %v844
  %v846 = vrot.slane %v824, 7
  %v847 = vsel %vm108, %v844, %v846
  %v848 = vrot.slane %v826, 7
  %v849 = vsel %vm108, %v846, %v848
  %v850 = vrot.slane %v828, 7
  %v851 = vsel %vm108, %v848, %v850
  %v852 = vrot.slane %v830, 7
  %v853 = vsel %vm108, %v850, %v852
  %v854 = vrot.slane %v832, 7
  %v855 = vsel %vm108, %v852, %v854
  %v856 = vrot.slane %v834, 7
  %v857 = vsel %vm108, %v854, %v856
  %v866 = vsel %vm108, 0.0, %v843
  %vm867 = vcmp.lt.s32.totalorder %v158, 0
  %v868 = vsub.s32 0, %v158
  %v869 = vsel %vm867, %v868, %v158
  %v870 = vshrl.u32 %v869, 3
  %v871 = vand.u32 %v869, 7
  %v872 = vsub.s32 0, %v871
  %v873 = vsel %vm867, %v872, %v871
  %vm874 = vcmp.lt.s32.totalorder %v159, 0
  %v875 = vsub.s32 0, %v159
  %v876 = vsel %vm874, %v875, %v159
  %v877 = vshrl.u32 %v876, 3
  %v878 = vand.u32 %v876, 7
  %v879 = vsub.s32 0, %v878
  %v880 = vsel %vm874, %v879, %v878
  %vm881 = vcmp.lt.s32.totalorder %v160, 0
  %v882 = vsub.s32 0, %v160
  %v883 = vsel %vm881, %v882, %v160
  %v884 = vshrl.u32 %v883, 3
  %v885 = vand.u32 %v883, 7
  %v886 = vsub.s32 0, %v885
  %v887 = vsel %vm881, %v886, %v885
  %vm888 = vcmp.lt.s32.totalorder %v161, 0
  %v889 = vsub.s32 0, %v161
  %v890 = vsel %vm888, %v889, %v161
  %v891 = vshrl.u32 %v890, 3
  %v892 = vand.u32 %v890, 7
  %v893 = vsub.s32 0, %v892
  %v894 = vsel %vm888, %v893, %v892
  %vm895 = vcmp.lt.s32.totalorder %v162, 0
  %v896 = vsub.s32 0, %v162
  %v897 = vsel %vm895, %v896, %v162
  %v898 = vshrl.u32 %v897, 3
  %v899 = vand.u32 %v897, 7
  %v900 = vsub.s32 0, %v899
  %v901 = vsel %vm895, %v900, %v899
  %vm902 = vcmp.lt.s32.totalorder %v163, 0
  %v903 = vsub.s32 0, %v163
  %v904 = vsel %vm902, %v903, %v163
  %v905 = vshrl.u32 %v904, 3
  %v906 = vand.u32 %v904, 7
  %v907 = vsub.s32 0, %v906
  %v908 = vsel %vm902, %v907, %v906
  %vm909 = vcmp.lt.s32.totalorder %v164, 0
  %v910 = vsub.s32 0, %v164
  %v911 = vsel %vm909, %v910, %v164
  %v912 = vshrl.u32 %v911, 3
  %v913 = vand.u32 %v911, 7
  %v914 = vsub.s32 0, %v913
  %v915 = vsel %vm909, %v914, %v913
  %vm916 = vcmp.lt.s32.totalorder %v165, 0
  %v917 = vsub.s32 0, %v165
  %v918 = vsel %vm916, %v917, %v165
  %v919 = vshrl.u32 %v918, 3
  %v920 = vand.u32 %v918, 7
  %v921 = vsub.s32 0, %v920
  %v922 = vsel %vm916, %v921, %v920
  %vm923 = vcmp.ne.s32.totalorder %v873, 0
  %vm924 = vcmp.ne.s32.totalorder %v880, 0
  %vm925 = vcmp.ne.s32.totalorder %v887, 0
  %vm926 = vcmp.ne.s32.totalorder %v894, 0
  %vm927 = vcmp.ne.s32.totalorder %v901, 0
  %vm928 = vcmp.ne.s32.totalorder %v908, 0
  %vm929 = vcmp.ne.s32.totalorder %v915, 0
  %vm930 = vcmp.ne.s32.totalorder %v922, 0
  %vm931 = vcmp.lt.s32.totalorder %v873, 0
  %vm932 = vcmp.lt.s32.totalorder %v880, 0
  %vm933 = vcmp.lt.s32.totalorder %v887, 0
  %vm934 = vcmp.lt.s32.totalorder %v894, 0
  %vm935 = vcmp.lt.s32.totalorder %v901, 0
  %vm936 = vcmp.lt.s32.totalorder %v908, 0
  %vm937 = vcmp.lt.s32.totalorder %v915, 0
  %vm938 = vcmp.lt.s32.totalorder %v922, 0
  %vm939 = vmand %vm931, %vm923
  %vm940 = vmand %vm932, %vm924
  %vm941 = vmand %vm933, %vm925
  %vm942 = vmand %vm934, %vm926
  %vm943 = vmand %vm935, %vm927
  %vm944 = vmand %vm936, %vm928
  %vm945 = vmand %vm937, %vm929
  %vm946 = vmand %vm938, %vm930
  %v947 = vadd.s32 %v873, 8
  %v948 = vadd.s32 %v880, 8
  %v949 = vadd.s32 %v887, 8
  %v950 = vadd.s32 %v894, 8
  %v951 = vadd.s32 %v901, 8
  %v952 = vadd.s32 %v908, 8
  %v953 = vadd.s32 %v915, 8
  %v954 = vadd.s32 %v922, 8
  %v955 = vsel %vm939, %v947, %v873
  %v956 = vsel %vm940, %v948, %v880
  %v957 = vsel %vm941, %v949, %v887
  %v958 = vsel %vm942, %v950, %v894
  %v959 = vsel %vm943, %v951, %v901
  %v960 = vsel %vm944, %v952, %v908
  %v961 = vsel %vm945, %v953, %v915
  %v962 = vsel %vm946, %v954, %v922
  %vm963 = vcmp.eq.s32.totalorder %v955, 0
  %vm964 = vcmp.eq.s32.totalorder %v956, 0
  %vm965 = vcmp.eq.s32.totalorder %v957, 0
  %vm966 = vcmp.eq.s32.totalorder %v958, 0
  %vm967 = vcmp.eq.s32.totalorder %v959, 0
  %vm968 = vcmp.eq.s32.totalorder %v960, 0
  %vm969 = vcmp.eq.s32.totalorder %v961, 0
  %vm970 = vcmp.eq.s32.totalorder %v962, 0
  %v971 = vsel %vm963, 0.0, %v866
  %v972 = vsel %vm964, 0.0, %v845
  %v973 = vsel %vm965, 0.0, %v847
  %v974 = vsel %vm966, 0.0, %v849
  %v975 = vsel %vm967, 0.0, %v851
  %v976 = vsel %vm968, 0.0, %v853
  %v977 = vsel %vm969, 0.0, %v855
  %v978 = vsel %vm970, 0.0, %v857
  %v979 = vld [vmem:[%s2] sm:$0xff]
  %v980 = vld [vmem:[%s2 + $0x8] sm:$0xff]
  %v981 = vld [vmem:[%s2 + $0x10] sm:$0xff]
  %v982 = vld [vmem:[%s2 + $0x18] sm:$0xff]
  %v983 = vld [vmem:[%s2 + $0x20] sm:$0xff]
  %v984 = vld [vmem:[%s2 + $0x28] sm:$0xff]
  %v985 = vld [vmem:[%s2 + $0x30] sm:$0xff]
  %v986 = vld [vmem:[%s2 + $0x38] sm:$0xff]
  %v987 = vld [vmem:[%s2 + $0x40] sm:$0xff]
  %v988 = vld [vmem:[%s2 + $0x48] sm:$0xff]
  %v989 = vld [vmem:[%s2 + $0x50] sm:$0xff]
  %v990 = vld [vmem:[%s2 + $0x58] sm:$0xff]
  %v991 = vld [vmem:[%s2 + $0x60] sm:$0xff]
  %v992 = vld [vmem:[%s2 + $0x68] sm:$0xff]
  %v993 = vld [vmem:[%s2 + $0x70] sm:$0xff]
  %v994 = vld [vmem:[%s2 + $0x78] sm:$0xff]
  %v995 = vld [vmem:[%s2 + $0x80] sm:$0xff]
  %v996 = vld [vmem:[%s2 + $0x88] sm:$0xff]
  %v997 = vld [vmem:[%s2 + $0x90] sm:$0xff]
  %v998 = vld [vmem:[%s2 + $0x98] sm:$0xff]
  %v999 = vld [vmem:[%s2 + $0xa0] sm:$0xff]
  %v1000 = vld [vmem:[%s2 + $0xa8] sm:$0xff]
  %v1001 = vld [vmem:[%s2 + $0xb0] sm:$0xff]
  %v1002 = vld [vmem:[%s2 + $0xb8] sm:$0xff]
  %v1003 = vld [vmem:[%s2 + $0xc0] sm:$0xff]
  %v1004 = vld [vmem:[%s2 + $0xc8] sm:$0xff]
  %v1005 = vld [vmem:[%s2 + $0xd0] sm:$0xff]
  %v1006 = vld [vmem:[%s2 + $0xd8] sm:$0xff]
  %v1007 = vld [vmem:[%s2 + $0xe0] sm:$0xff]
  %v1008 = vld [vmem:[%s2 + $0xe8] sm:$0xff]
  %v1009 = vld [vmem:[%s2 + $0xf0] sm:$0xff]
  %v1010 = vld [vmem:[%s2 + $0xf8] sm:$0xff]
  %v1011 = vld [vmem:[%s2 + $0x100] sm:$0xff]
  %v1012 = vld [vmem:[%s2 + $0x108] sm:$0xff]
  %v1013 = vld [vmem:[%s2 + $0x110] sm:$0xff]
  %v1014 = vld [vmem:[%s2 + $0x118] sm:$0xff]
  %v1015 = vld [vmem:[%s2 + $0x120] sm:$0xff]
  %v1016 = vld [vmem:[%s2 + $0x128] sm:$0xff]
  %v1017 = vld [vmem:[%s2 + $0x130] sm:$0xff]
  %v1018 = vld [vmem:[%s2 + $0x138] sm:$0xff]
  %v1019 = vld [vmem:[%s2 + $0x140] sm:$0xff]
  %v1020 = vld [vmem:[%s2 + $0x148] sm:$0xff]
  %v1021 = vld [vmem:[%s2 + $0x150] sm:$0xff]
  %v1022 = vld [vmem:[%s2 + $0x158] sm:$0xff]
  %v1023 = vld [vmem:[%s2 + $0x160] sm:$0xff]
  %v1024 = vld [vmem:[%s2 + $0x168] sm:$0xff]
  %v1025 = vld [vmem:[%s2 + $0x170] sm:$0xff]
  %v1026 = vld [vmem:[%s2 + $0x178] sm:$0xff]
  %v1027 = vlaneseq
  %v1028 = vshrl.u32 %v1027, 7
  %v1029 = vsub.s32 1, %v1028
  %v1030 = vrot.slane %v28, %v1029
  %1031 = vmatprep.subr.mxu0 0.0
  %1032 = vmatpush1.msra.mxu0 %v994
  %1033 = vmatprep.subr.mxu0 0.0
  %1034 = vmatpush1.msra.mxu0 %v993
  %1035 = vmatprep.subr.mxu0 0.0
  %1036 = vmatpush1.msra.mxu0 %v992
  %1037 = vmatprep.subr.mxu0 0.0
  %1038 = vmatpush1.msra.mxu0 %v991
  %1039 = vmatprep.subr.mxu0 0.0
  %1040 = vmatpush1.msra.mxu0 %v990
  %1041 = vmatprep.subr.mxu0 0.0
  %1042 = vmatpush1.msra.mxu0 %v989
  %1043 = vmatprep.subr.mxu0 0.0
  %1044 = vmatpush1.msra.mxu0 %v988
  %1045 = vmatprep.subr.mxu0 0.0
  %1046 = vmatpush1.msra.mxu0 %v987
  %1047 = vmatprep.subr.mxu0 0.0
  %1048 = vmatpush1.msra.mxu0 %v986
  %1049 = vmatprep.subr.mxu0 0.0
  %1050 = vmatpush1.msra.mxu0 %v985
  %1051 = vmatprep.subr.mxu0 0.0
  %1052 = vmatpush1.msra.mxu0 %v984
  %1053 = vmatprep.subr.mxu0 0.0
  %1054 = vmatpush1.msra.mxu0 %v983
  %1055 = vmatprep.subr.mxu0 0.0
  %1056 = vmatpush1.msra.mxu0 %v982
  %1057 = vmatprep.subr.mxu0 0.0
  %1058 = vmatpush1.msra.mxu0 %v981
  %1059 = vmatprep.subr.mxu0 0.0
  %1060 = vmatpush1.msra.mxu0 %v980
  %1061 = vmatprep.subr.mxu0 0.0
  %1062 = vmatpush1.msra.mxu0 %v979
  %1063 = vmatprep.subr.mxu0 0.0
  %1064 = vmatpush2.msra.mxu0 %v1010
  %1065 = vmatprep.subr.mxu0 0.0
  %1066 = vmatpush2.msra.mxu0 %v1009
  %1067 = vmatprep.subr.mxu0 0.0
  %1068 = vmatpush2.msra.mxu0 %v1008
  %1069 = vmatprep.subr.mxu0 0.0
  %1070 = vmatpush2.msra.mxu0 %v1007
  %1071 = vmatprep.subr.mxu0 0.0
  %1072 = vmatpush2.msra.mxu0 %v1006
  %1073 = vmatprep.subr.mxu0 0.0
  %1074 = vmatpush2.msra.mxu0 %v1005
  %1075 = vmatprep.subr.mxu0 0.0
  %1076 = vmatpush2.msra.mxu0 %v1004
  %1077 = vmatprep.subr.mxu0 0.0
  %1078 = vmatpush2.msra.mxu0 %v1003
  %1079 = vmatprep.subr.mxu0 0.0
  %1080 = vmatpush2.msra.mxu0 %v1002
  %1081 = vmatprep.subr.mxu0 0.0
  %1082 = vmatpush2.msra.mxu0 %v1001
  %1083 = vmatprep.subr.mxu0 0.0
  %1084 = vmatpush2.msra.mxu0 %v1000
  %1085 = vmatprep.subr.mxu0 0.0
  %1086 = vmatpush2.msra.mxu0 %v999
  %1087 = vmatprep.subr.mxu0 0.0
  %1088 = vmatpush2.msra.mxu0 %v998
  %1089 = vmatprep.subr.mxu0 0.0
  %1090 = vmatpush2.msra.mxu0 %v997
  %1091 = vmatprep.subr.mxu0 0.0
  %1092 = vmatpush2.msra.mxu0 %v996
  %1093 = vmatprep.subr.mxu0 0.0
  %1094 = vmatpush2.msra.mxu0 %v995
  %1095 = vmatprep.mubr.f32.mxu0 %v804
  %1096 = vmatmul.mubr.f32.gmra.mxu0 %v971
  %v1097 = vpop.f32.mrf.mxu0
  %v1098 = vadd.f32 %v1030, %v1097
  %v1099 = vpop.f32.mrf.mxu0
  %1100 = vmatprep.mubr.f32.mxu0 %v806
  %1101 = vmatmul.mubr.f32.gmra.mxu0 %v972
  %v1102 = vpop.f32.mrf.mxu0
  %v1103 = vadd.f32 %v1030, %v1102
  %v1104 = vpop.f32.mrf.mxu0
  %1105 = vmatprep.mubr.f32.mxu0 %v808
  %1106 = vmatmul.mubr.f32.gmra.mxu0 %v973
  %v1107 = vpop.f32.mrf.mxu0
  %v1108 = vadd.f32 %v1030, %v1107
  %v1109 = vpop.f32.mrf.mxu0
  %1110 = vmatprep.mubr.f32.mxu0 %v810
  %1111 = vmatmul.mubr.f32.gmra.mxu0 %v974
  %v1112 = vpop.f32.mrf.mxu0
  %v1113 = vadd.f32 %v1030, %v1112
  %v1114 = vpop.f32.mrf.mxu0
  %1115 = vmatprep.mubr.f32.mxu0 %v812
  %1116 = vmatmul.mubr.f32.gmra.mxu0 %v975
  %v1117 = vpop.f32.mrf.mxu0
  %v1118 = vadd.f32 %v1030, %v1117
  %v1119 = vpop.f32.mrf.mxu0
  %1120 = vmatprep.mubr.f32.mxu0 %v814
  %1121 = vmatmul.mubr.f32.gmra.mxu0 %v976
  %v1122 = vpop.f32.mrf.mxu0
  %v1123 = vadd.f32 %v1030, %v1122
  %v1124 = vpop.f32.mrf.mxu0
  %1125 = vmatprep.mubr.f32.mxu0 %v816
  %1126 = vmatmul.mubr.f32.gmra.mxu0 %v977
  %v1127 = vpop.f32.mrf.mxu0
  %v1128 = vadd.f32 %v1030, %v1127
  %v1129 = vpop.f32.mrf.mxu0
  %1130 = vmatprep.mubr.f32.mxu0 %v818
  %1131 = vmatmul.mubr.f32.gmra.mxu0 %v978
  %v1132 = vpop.f32.mrf.mxu0
  %v1133 = vadd.f32 %v1030, %v1132
  %v1134 = vpop.f32.mrf.mxu0
  %1135 = vdwg.mxu0
  %1136 = vmatprep.subr.mxu0 0.0
  %1137 = vmatpush1.msra.mxu0 %v1026
  %1138 = vmatprep.subr.mxu0 0.0
  %1139 = vmatpush1.msra.mxu0 %v1025
  %1140 = vmatprep.subr.mxu0 0.0
  %1141 = vmatpush1.msra.mxu0 %v1024
  %1142 = vmatprep.subr.mxu0 0.0
  %1143 = vmatpush1.msra.mxu0 %v1023
  %1144 = vmatprep.subr.mxu0 0.0
  %1145 = vmatpush1.msra.mxu0 %v1022
  %1146 = vmatprep.subr.mxu0 0.0
  %1147 = vmatpush1.msra.mxu0 %v1021
  %1148 = vmatprep.subr.mxu0 0.0
  %1149 = vmatpush1.msra.mxu0 %v1020
  %1150 = vmatprep.subr.mxu0 0.0
  %1151 = vmatpush1.msra.mxu0 %v1019
  %1152 = vmatprep.subr.mxu0 0.0
  %1153 = vmatpush1.msra.mxu0 %v1018
  %1154 = vmatprep.subr.mxu0 0.0
  %1155 = vmatpush1.msra.mxu0 %v1017
  %1156 = vmatprep.subr.mxu0 0.0
  %1157 = vmatpush1.msra.mxu0 %v1016
  %1158 = vmatprep.subr.mxu0 0.0
  %1159 = vmatpush1.msra.mxu0 %v1015
  %1160 = vmatprep.subr.mxu0 0.0
  %1161 = vmatpush1.msra.mxu0 %v1014
  %1162 = vmatprep.subr.mxu0 0.0
  %1163 = vmatpush1.msra.mxu0 %v1013
  %1164 = vmatprep.subr.mxu0 0.0
  %1165 = vmatpush1.msra.mxu0 %v1012
  %1166 = vmatprep.subr.mxu0 0.0
  %1167 = vmatpush1.msra.mxu0 %v1011
  %1168 = vmatprep.subr.mxu0 0.0
  %1169 = vmatpush2.msra.mxu0 0.0
  %1170 = vmatprep.subr.mxu0 0.0
  %1171 = vmatpush2.msra.mxu0 0.0
  %1172 = vmatprep.subr.mxu0 0.0
  %1173 = vmatpush2.msra.mxu0 0.0
  %1174 = vmatprep.subr.mxu0 0.0
  %1175 = vmatpush2.msra.mxu0 0.0
  %1176 = vmatprep.subr.mxu0 0.0
  %1177 = vmatpush2.msra.mxu0 0.0
  %1178 = vmatprep.subr.mxu0 0.0
  %1179 = vmatpush2.msra.mxu0 0.0
  %1180 = vmatprep.subr.mxu0 0.0
  %1181 = vmatpush2.msra.mxu0 0.0
  %1182 = vmatprep.subr.mxu0 0.0
  %1183 = vmatpush2.msra.mxu0 0.0
  %1184 = vmatprep.subr.mxu0 0.0
  %1185 = vmatpush2.msra.mxu0 0.0
  %1186 = vmatprep.subr.mxu0 0.0
  %1187 = vmatpush2.msra.mxu0 0.0
  %1188 = vmatprep.subr.mxu0 0.0
  %1189 = vmatpush2.msra.mxu0 0.0
  %1190 = vmatprep.subr.mxu0 0.0
  %1191 = vmatpush2.msra.mxu0 0.0
  %1192 = vmatprep.subr.mxu0 0.0
  %1193 = vmatpush2.msra.mxu0 0.0
  %1194 = vmatprep.subr.mxu0 0.0
  %1195 = vmatpush2.msra.mxu0 0.0
  %1196 = vmatprep.subr.mxu0 0.0
  %1197 = vmatpush2.msra.mxu0 0.0
  %1198 = vmatprep.subr.mxu0 0.0
  %1199 = vmatpush2.msra.mxu0 0.0
  %1200 = vmatprep.mubr.f32.mxu0 0.0
  %1201 = vmatmul.mubr.f32.gmra.mxu0 %v820
  %v1202 = vpop.f32.mrf.mxu0
  %v1203 = vadd.f32 %v1098, %v1202
  %v1204 = vpop.f32.mrf.mxu0
  %1205 = vmatprep.mubr.f32.mxu0 0.0
  %1206 = vmatmul.mubr.f32.gmra.mxu0 %v822
  %v1207 = vpop.f32.mrf.mxu0
  %v1208 = vadd.f32 %v1103, %v1207
  %v1209 = vpop.f32.mrf.mxu0
  %1210 = vmatprep.mubr.f32.mxu0 0.0
  %1211 = vmatmul.mubr.f32.gmra.mxu0 %v824
  %v1212 = vpop.f32.mrf.mxu0
  %v1213 = vadd.f32 %v1108, %v1212
  %v1214 = vpop.f32.mrf.mxu0
  %1215 = vmatprep.mubr.f32.mxu0 0.0
  %1216 = vmatmul.mubr.f32.gmra.mxu0 %v826
  %v1217 = vpop.f32.mrf.mxu0
  %v1218 = vadd.f32 %v1113, %v1217
  %v1219 = vpop.f32.mrf.mxu0
  %1220 = vmatprep.mubr.f32.mxu0 0.0
  %1221 = vmatmul.mubr.f32.gmra.mxu0 %v828
  %v1222 = vpop.f32.mrf.mxu0
  %v1223 = vadd.f32 %v1118, %v1222
  %v1224 = vpop.f32.mrf.mxu0
  %1225 = vmatprep.mubr.f32.mxu0 0.0
  %1226 = vmatmul.mubr.f32.gmra.mxu0 %v830
  %v1227 = vpop.f32.mrf.mxu0
  %v1228 = vadd.f32 %v1123, %v1227
  %v1229 = vpop.f32.mrf.mxu0
  %1230 = vmatprep.mubr.f32.mxu0 0.0
  %1231 = vmatmul.mubr.f32.gmra.mxu0 %v832
  %v1232 = vpop.f32.mrf.mxu0
  %v1233 = vadd.f32 %v1128, %v1232
  %v1234 = vpop.f32.mrf.mxu0
  %1235 = vmatprep.mubr.f32.mxu0 0.0
  %1236 = vmatmul.mubr.f32.gmra.mxu0 %v834
  %v1237 = vpop.f32.mrf.mxu0
  %v1238 = vadd.f32 %v1133, %v1237
  %v1239 = vpop.f32.mrf.mxu0
  %1240 = vdwg.mxu0
  %vm1241 = vcmp.gt.f32.partialorder %v1203, 0.0
  %vm1242 = vcmp.gt.f32.partialorder %v1208, 0.0
  %vm1243 = vcmp.gt.f32.partialorder %v1213, 0.0
  %vm1244 = vcmp.gt.f32.partialorder %v1218, 0.0
  %vm1245 = vcmp.gt.f32.partialorder %v1223, 0.0
  %vm1246 = vcmp.gt.f32.partialorder %v1228, 0.0
  %vm1247 = vcmp.gt.f32.partialorder %v1233, 0.0
  %vm1248 = vcmp.gt.f32.partialorder %v1238, 0.0
  %v1249 = vmul.f32 %v1203, 0.01
  %v1250 = vmul.f32 %v1208, 0.01
  %v1251 = vmul.f32 %v1213, 0.01
  %v1252 = vmul.f32 %v1218, 0.01
  %v1253 = vmul.f32 %v1223, 0.01
  %v1254 = vmul.f32 %v1228, 0.01
  %v1255 = vmul.f32 %v1233, 0.01
  %v1256 = vmul.f32 %v1238, 0.01
  %v1257 = vsel %vm1241, %v1203, %v1249
  %v1258 = vsel %vm1242, %v1208, %v1250
  %v1259 = vsel %vm1243, %v1213, %v1251
  %v1260 = vsel %vm1244, %v1218, %v1252
  %v1261 = vsel %vm1245, %v1223, %v1253
  %v1262 = vsel %vm1246, %v1228, %v1254
  %v1263 = vsel %vm1247, %v1233, %v1255
  %v1264 = vsel %vm1248, %v1238, %v1256
  %1265 = vst [vmem:[#allocation3] sm:$0xff] %v1257
  %1266 = vst [vmem:[#allocation3 + $0x8] sm:$0xff] %v1258
  %1267 = vst [vmem:[#allocation3 + $0x10] sm:$0xff] %v1259
  %1268 = vst [vmem:[#allocation3 + $0x18] sm:$0xff] %v1260
  %1269 = vst [vmem:[#allocation3 + $0x20] sm:$0xff] %v1261
  %1270 = vst [vmem:[#allocation3 + $0x28] sm:$0xff] %v1262
  %1271 = vst [vmem:[#allocation3 + $0x30] sm:$0xff] %v1263
  %1272 = vst [vmem:[#allocation3 + $0x38] sm:$0xff] %v1264
  %v1273 = vld [vmem:[#allocation3] ss:$2 sm:$0xff]
  %s1274 = scalar_lea.vmem [#allocation3], 16
  %v1275 = vld [vmem:[%s1274] ss:$2 sm:$0xff]
  %s1276 = scalar_lea.vmem [#allocation3], 32
  %v1277 = vld [vmem:[%s1276] ss:$2 sm:$0xff]
  %s1278 = scalar_lea.vmem [#allocation3], 48
  %v1279 = vld [vmem:[%s1278] ss:$2 sm:$0xff]
  %s1280 = scalar_lea.vmem [#allocation3], 1
  %v1281 = vld [vmem:[%s1280] ss:$2 sm:$0xff]
  %s1282 = scalar_lea.vmem [#allocation3], 17
  %v1283 = vld [vmem:[%s1282] ss:$2 sm:$0xff]
  %s1284 = scalar_lea.vmem [#allocation3], 33
  %v1285 = vld [vmem:[%s1284] ss:$2 sm:$0xff]
  %s1286 = scalar_lea.vmem [#allocation3], 49
  %v1287 = vld [vmem:[%s1286] ss:$2 sm:$0xff]
  %v1292 = vrot.slane %v1281, 7
  %v1293 = vrot.slane %v1283, 7
  %v1294 = vsel %vm108, %v1292, %v1293
  %v1295 = vrot.slane %v1285, 7
  %v1296 = vsel %vm108, %v1293, %v1295
  %v1297 = vrot.slane %v1287, 7
  %v1298 = vsel %vm108, %v1295, %v1297
  %v1303 = vsel %vm108, 0.0, %v1292
  %vm1304 = vcmp.lt.s32.totalorder %v158, 0
  %v1305 = vsub.s32 0, %v158
  %v1306 = vsel %vm1304, %v1305, %v158
  %v1307 = vshrl.u32 %v1306, 2
  %v1308 = vand.u32 %v1306, 3
  %v1309 = vsub.s32 0, %v1308
  %v1310 = vsel %vm1304, %v1309, %v1308
  %vm1311 = vcmp.lt.s32.totalorder %v159, 0
  %v1312 = vsub.s32 0, %v159
  %v1313 = vsel %vm1311, %v1312, %v159
  %v1314 = vshrl.u32 %v1313, 2
  %v1315 = vand.u32 %v1313, 3
  %v1316 = vsub.s32 0, %v1315
  %v1317 = vsel %vm1311, %v1316, %v1315
  %vm1318 = vcmp.lt.s32.totalorder %v160, 0
  %v1319 = vsub.s32 0, %v160
  %v1320 = vsel %vm1318, %v1319, %v160
  %v1321 = vshrl.u32 %v1320, 2
  %v1322 = vand.u32 %v1320, 3
  %v1323 = vsub.s32 0, %v1322
  %v1324 = vsel %vm1318, %v1323, %v1322
  %vm1325 = vcmp.lt.s32.totalorder %v161, 0
  %v1326 = vsub.s32 0, %v161
  %v1327 = vsel %vm1325, %v1326, %v161
  %v1328 = vshrl.u32 %v1327, 2
  %v1329 = vand.u32 %v1327, 3
  %v1330 = vsub.s32 0, %v1329
  %v1331 = vsel %vm1325, %v1330, %v1329
  %vm1332 = vcmp.ne.s32.totalorder %v1310, 0
  %vm1333 = vcmp.ne.s32.totalorder %v1317, 0
  %vm1334 = vcmp.ne.s32.totalorder %v1324, 0
  %vm1335 = vcmp.ne.s32.totalorder %v1331, 0
  %vm1336 = vcmp.lt.s32.totalorder %v1310, 0
  %vm1337 = vcmp.lt.s32.totalorder %v1317, 0
  %vm1338 = vcmp.lt.s32.totalorder %v1324, 0
  %vm1339 = vcmp.lt.s32.totalorder %v1331, 0
  %vm1340 = vmand %vm1336, %vm1332
  %vm1341 = vmand %vm1337, %vm1333
  %vm1342 = vmand %vm1338, %vm1334
  %vm1343 = vmand %vm1339, %vm1335
  %v1344 = vadd.s32 %v1310, 4
  %v1345 = vadd.s32 %v1317, 4
  %v1346 = vadd.s32 %v1324, 4
  %v1347 = vadd.s32 %v1331, 4
  %v1348 = vsel %vm1340, %v1344, %v1310
  %v1349 = vsel %vm1341, %v1345, %v1317
  %v1350 = vsel %vm1342, %v1346, %v1324
  %v1351 = vsel %vm1343, %v1347, %v1331
  %vm1352 = vcmp.eq.s32.totalorder %v1348, 0
  %vm1353 = vcmp.eq.s32.totalorder %v1349, 0
  %vm1354 = vcmp.eq.s32.totalorder %v1350, 0
  %vm1355 = vcmp.eq.s32.totalorder %v1351, 0
  %v1356 = vsel %vm1352, 0.0, %v1303
  %v1357 = vsel %vm1353, 0.0, %v1294
  %v1358 = vsel %vm1354, 0.0, %v1296
  %v1359 = vsel %vm1355, 0.0, %v1298
  %v1360 = vld [vmem:[%s3] sm:$0xff]
  %v1361 = vld [vmem:[%s3 + $0x8] sm:$0xff]
  %v1362 = vld [vmem:[%s3 + $0x10] sm:$0xff]
  %v1363 = vld [vmem:[%s3 + $0x18] sm:$0xff]
  %v1364 = vld [vmem:[%s3 + $0x20] sm:$0xff]
  %v1365 = vld [vmem:[%s3 + $0x28] sm:$0xff]
  %v1366 = vld [vmem:[%s3 + $0x30] sm:$0xff]
  %v1367 = vld [vmem:[%s3 + $0x38] sm:$0xff]
  %v1368 = vld [vmem:[%s3 + $0x40] sm:$0xff]
  %v1369 = vld [vmem:[%s3 + $0x48] sm:$0xff]
  %v1370 = vld [vmem:[%s3 + $0x50] sm:$0xff]
  %v1371 = vld [vmem:[%s3 + $0x58] sm:$0xff]
  %v1372 = vld [vmem:[%s3 + $0x60] sm:$0xff]
  %v1373 = vld [vmem:[%s3 + $0x68] sm:$0xff]
  %v1374 = vld [vmem:[%s3 + $0x70] sm:$0xff]
  %v1375 = vld [vmem:[%s3 + $0x78] sm:$0xff]
  %v1376 = vld [vmem:[%s3 + $0x80] sm:$0xff]
  %v1377 = vld [vmem:[%s3 + $0x88] sm:$0xff]
  %v1378 = vld [vmem:[%s3 + $0x90] sm:$0xff]
  %v1379 = vld [vmem:[%s3 + $0x98] sm:$0xff]
  %v1380 = vld [vmem:[%s3 + $0xa0] sm:$0xff]
  %v1381 = vld [vmem:[%s3 + $0xa8] sm:$0xff]
  %v1382 = vld [vmem:[%s3 + $0xb0] sm:$0xff]
  %v1383 = vld [vmem:[%s3 + $0xb8] sm:$0xff]
  %v1384 = vld [vmem:[%s3 + $0xc0] sm:$0xff]
  %v1385 = vld [vmem:[%s3 + $0xc8] sm:$0xff]
  %v1386 = vld [vmem:[%s3 + $0xd0] sm:$0xff]
  %v1387 = vld [vmem:[%s3 + $0xd8] sm:$0xff]
  %v1388 = vld [vmem:[%s3 + $0xe0] sm:$0xff]
  %v1389 = vld [vmem:[%s3 + $0xe8] sm:$0xff]
  %v1390 = vld [vmem:[%s3 + $0xf0] sm:$0xff]
  %v1391 = vld [vmem:[%s3 + $0xf8] sm:$0xff]
  %v1392 = vld [vmem:[%s3 + $0x100] sm:$0xff]
  %v1393 = vld [vmem:[%s3 + $0x108] sm:$0xff]
  %v1394 = vld [vmem:[%s3 + $0x110] sm:$0xff]
  %v1395 = vld [vmem:[%s3 + $0x118] sm:$0xff]
  %v1396 = vld [vmem:[%s3 + $0x120] sm:$0xff]
  %v1397 = vld [vmem:[%s3 + $0x128] sm:$0xff]
  %v1398 = vld [vmem:[%s3 + $0x130] sm:$0xff]
  %v1399 = vld [vmem:[%s3 + $0x138] sm:$0xff]
  %v1400 = vld [vmem:[%s3 + $0x140] sm:$0xff]
  %v1401 = vld [vmem:[%s3 + $0x148] sm:$0xff]
  %v1402 = vld [vmem:[%s3 + $0x150] sm:$0xff]
  %v1403 = vld [vmem:[%s3 + $0x158] sm:$0xff]
  %v1404 = vld [vmem:[%s3 + $0x160] sm:$0xff]
  %v1405 = vld [vmem:[%s3 + $0x168] sm:$0xff]
  %v1406 = vld [vmem:[%s3 + $0x170] sm:$0xff]
  %v1407 = vld [vmem:[%s3 + $0x178] sm:$0xff]
  %v1408 = vlaneseq
  %v1409 = vshrl.u32 %v1408, 7
  %v1410 = vsub.s32 2, %v1409
  %v1411 = vrot.slane %v28, %v1410
  %1412 = vmatprep.subr.mxu0 0.0
  %1413 = vmatpush1.msra.mxu0 %v1375
  %1414 = vmatprep.subr.mxu0 0.0
  %1415 = vmatpush1.msra.mxu0 %v1374
  %1416 = vmatprep.subr.mxu0 0.0
  %1417 = vmatpush1.msra.mxu0 %v1373
  %1418 = vmatprep.subr.mxu0 0.0
  %1419 = vmatpush1.msra.mxu0 %v1372
  %1420 = vmatprep.subr.mxu0 0.0
  %1421 = vmatpush1.msra.mxu0 %v1371
  %1422 = vmatprep.subr.mxu0 0.0
  %1423 = vmatpush1.msra.mxu0 %v1370
  %1424 = vmatprep.subr.mxu0 0.0
  %1425 = vmatpush1.msra.mxu0 %v1369
  %1426 = vmatprep.subr.mxu0 0.0
  %1427 = vmatpush1.msra.mxu0 %v1368
  %1428 = vmatprep.subr.mxu0 0.0
  %1429 = vmatpush1.msra.mxu0 %v1367
  %1430 = vmatprep.subr.mxu0 0.0
  %1431 = vmatpush1.msra.mxu0 %v1366
  %1432 = vmatprep.subr.mxu0 0.0
  %1433 = vmatpush1.msra.mxu0 %v1365
  %1434 = vmatprep.subr.mxu0 0.0
  %1435 = vmatpush1.msra.mxu0 %v1364
  %1436 = vmatprep.subr.mxu0 0.0
  %1437 = vmatpush1.msra.mxu0 %v1363
  %1438 = vmatprep.subr.mxu0 0.0
  %1439 = vmatpush1.msra.mxu0 %v1362
  %1440 = vmatprep.subr.mxu0 0.0
  %1441 = vmatpush1.msra.mxu0 %v1361
  %1442 = vmatprep.subr.mxu0 0.0
  %1443 = vmatpush1.msra.mxu0 %v1360
  %1444 = vmatprep.subr.mxu0 0.0
  %1445 = vmatpush2.msra.mxu0 %v1391
  %1446 = vmatprep.subr.mxu0 0.0
  %1447 = vmatpush2.msra.mxu0 %v1390
  %1448 = vmatprep.subr.mxu0 0.0
  %1449 = vmatpush2.msra.mxu0 %v1389
  %1450 = vmatprep.subr.mxu0 0.0
  %1451 = vmatpush2.msra.mxu0 %v1388
  %1452 = vmatprep.subr.mxu0 0.0
  %1453 = vmatpush2.msra.mxu0 %v1387
  %1454 = vmatprep.subr.mxu0 0.0
  %1455 = vmatpush2.msra.mxu0 %v1386
  %1456 = vmatprep.subr.mxu0 0.0
  %1457 = vmatpush2.msra.mxu0 %v1385
  %1458 = vmatprep.subr.mxu0 0.0
  %1459 = vmatpush2.msra.mxu0 %v1384
  %1460 = vmatprep.subr.mxu0 0.0
  %1461 = vmatpush2.msra.mxu0 %v1383
  %1462 = vmatprep.subr.mxu0 0.0
  %1463 = vmatpush2.msra.mxu0 %v1382
  %1464 = vmatprep.subr.mxu0 0.0
  %1465 = vmatpush2.msra.mxu0 %v1381
  %1466 = vmatprep.subr.mxu0 0.0
  %1467 = vmatpush2.msra.mxu0 %v1380
  %1468 = vmatprep.subr.mxu0 0.0
  %1469 = vmatpush2.msra.mxu0 %v1379
  %1470 = vmatprep.subr.mxu0 0.0
  %1471 = vmatpush2.msra.mxu0 %v1378
  %1472 = vmatprep.subr.mxu0 0.0
  %1473 = vmatpush2.msra.mxu0 %v1377
  %1474 = vmatprep.subr.mxu0 0.0
  %1475 = vmatpush2.msra.mxu0 %v1376
  %1476 = vmatprep.mubr.f32.mxu0 %v1273
  %1477 = vmatmul.mubr.f32.gmra.mxu0 %v1356
  %v1478 = vpop.f32.mrf.mxu0
  %v1479 = vadd.f32 %v1411, %v1478
  %v1480 = vpop.f32.mrf.mxu0
  %1481 = vmatprep.mubr.f32.mxu0 %v1275
  %1482 = vmatmul.mubr.f32.gmra.mxu0 %v1357
  %v1483 = vpop.f32.mrf.mxu0
  %v1484 = vadd.f32 %v1411, %v1483
  %v1485 = vpop.f32.mrf.mxu0
  %1486 = vmatprep.mubr.f32.mxu0 %v1277
  %1487 = vmatmul.mubr.f32.gmra.mxu0 %v1358
  %v1488 = vpop.f32.mrf.mxu0
  %v1489 = vadd.f32 %v1411, %v1488
  %v1490 = vpop.f32.mrf.mxu0
  %1491 = vmatprep.mubr.f32.mxu0 %v1279
  %1492 = vmatmul.mubr.f32.gmra.mxu0 %v1359
  %v1493 = vpop.f32.mrf.mxu0
  %v1494 = vadd.f32 %v1411, %v1493
  %v1495 = vpop.f32.mrf.mxu0
  %1496 = vdwg.mxu0
  %1497 = vmatprep.subr.mxu0 0.0
  %1498 = vmatpush1.msra.mxu0 %v1407
  %1499 = vmatprep.subr.mxu0 0.0
  %1500 = vmatpush1.msra.mxu0 %v1406
  %1501 = vmatprep.subr.mxu0 0.0
  %1502 = vmatpush1.msra.mxu0 %v1405
  %1503 = vmatprep.subr.mxu0 0.0
  %1504 = vmatpush1.msra.mxu0 %v1404
  %1505 = vmatprep.subr.mxu0 0.0
  %1506 = vmatpush1.msra.mxu0 %v1403
  %1507 = vmatprep.subr.mxu0 0.0
  %1508 = vmatpush1.msra.mxu0 %v1402
  %1509 = vmatprep.subr.mxu0 0.0
  %1510 = vmatpush1.msra.mxu0 %v1401
  %1511 = vmatprep.subr.mxu0 0.0
  %1512 = vmatpush1.msra.mxu0 %v1400
  %1513 = vmatprep.subr.mxu0 0.0
  %1514 = vmatpush1.msra.mxu0 %v1399
  %1515 = vmatprep.subr.mxu0 0.0
  %1516 = vmatpush1.msra.mxu0 %v1398
  %1517 = vmatprep.subr.mxu0 0.0
  %1518 = vmatpush1.msra.mxu0 %v1397
  %1519 = vmatprep.subr.mxu0 0.0
  %1520 = vmatpush1.msra.mxu0 %v1396
  %1521 = vmatprep.subr.mxu0 0.0
  %1522 = vmatpush1.msra.mxu0 %v1395
  %1523 = vmatprep.subr.mxu0 0.0
  %1524 = vmatpush1.msra.mxu0 %v1394
  %1525 = vmatprep.subr.mxu0 0.0
  %1526 = vmatpush1.msra.mxu0 %v1393
  %1527 = vmatprep.subr.mxu0 0.0
  %1528 = vmatpush1.msra.mxu0 %v1392
  %1529 = vmatprep.subr.mxu0 0.0
  %1530 = vmatpush2.msra.mxu0 0.0
  %1531 = vmatprep.subr.mxu0 0.0
  %1532 = vmatpush2.msra.mxu0 0.0
  %1533 = vmatprep.subr.mxu0 0.0
  %1534 = vmatpush2.msra.mxu0 0.0
  %1535 = vmatprep.subr.mxu0 0.0
  %1536 = vmatpush2.msra.mxu0 0.0
  %1537 = vmatprep.subr.mxu0 0.0
  %1538 = vmatpush2.msra.mxu0 0.0
  %1539 = vmatprep.subr.mxu0 0.0
  %1540 = vmatpush2.msra.mxu0 0.0
  %1541 = vmatprep.subr.mxu0 0.0
  %1542 = vmatpush2.msra.mxu0 0.0
  %1543 = vmatprep.subr.mxu0 0.0
  %1544 = vmatpush2.msra.mxu0 0.0
  %1545 = vmatprep.subr.mxu0 0.0
  %1546 = vmatpush2.msra.mxu0 0.0
  %1547 = vmatprep.subr.mxu0 0.0
  %1548 = vmatpush2.msra.mxu0 0.0
  %1549 = vmatprep.subr.mxu0 0.0
  %1550 = vmatpush2.msra.mxu0 0.0
  %1551 = vmatprep.subr.mxu0 0.0
  %1552 = vmatpush2.msra.mxu0 0.0
  %1553 = vmatprep.subr.mxu0 0.0
  %1554 = vmatpush2.msra.mxu0 0.0
  %1555 = vmatprep.subr.mxu0 0.0
  %1556 = vmatpush2.msra.mxu0 0.0
  %1557 = vmatprep.subr.mxu0 0.0
  %1558 = vmatpush2.msra.mxu0 0.0
  %1559 = vmatprep.subr.mxu0 0.0
  %1560 = vmatpush2.msra.mxu0 0.0
  %1561 = vmatprep.mubr.f32.mxu0 0.0
  %1562 = vmatmul.mubr.f32.gmra.mxu0 %v1281
  %v1563 = vpop.f32.mrf.mxu0
  %v1564 = vadd.f32 %v1479, %v1563
  %v1565 = vpop.f32.mrf.mxu0
  %1566 = vmatprep.mubr.f32.mxu0 0.0
  %1567 = vmatmul.mubr.f32.gmra.mxu0 %v1283
  %v1568 = vpop.f32.mrf.mxu0
  %v1569 = vadd.f32 %v1484, %v1568
  %v1570 = vpop.f32.mrf.mxu0
  %1571 = vmatprep.mubr.f32.mxu0 0.0
  %1572 = vmatmul.mubr.f32.gmra.mxu0 %v1285
  %v1573 = vpop.f32.mrf.mxu0
  %v1574 = vadd.f32 %v1489, %v1573
  %v1575 = vpop.f32.mrf.mxu0
  %1576 = vmatprep.mubr.f32.mxu0 0.0
  %1577 = vmatmul.mubr.f32.gmra.mxu0 %v1287
  %v1578 = vpop.f32.mrf.mxu0
  %v1579 = vadd.f32 %v1494, %v1578
  %v1580 = vpop.f32.mrf.mxu0
  %1581 = vdwg.mxu0
  %vm1582 = vcmp.gt.f32.partialorder %v1564, 0.0
  %vm1583 = vcmp.gt.f32.partialorder %v1569, 0.0
  %vm1584 = vcmp.gt.f32.partialorder %v1574, 0.0
  %vm1585 = vcmp.gt.f32.partialorder %v1579, 0.0
  %v1586 = vmul.f32 %v1564, 0.01
  %v1587 = vmul.f32 %v1569, 0.01
  %v1588 = vmul.f32 %v1574, 0.01
  %v1589 = vmul.f32 %v1579, 0.01
  %v1590 = vsel %vm1582, %v1564, %v1586
  %v1591 = vsel %vm1583, %v1569, %v1587
  %v1592 = vsel %vm1584, %v1574, %v1588
  %v1593 = vsel %vm1585, %v1579, %v1589
  %1594 = vst [vmem:[#allocation4] sm:$0xff] %v1590
  %1595 = vst [vmem:[#allocation4 + $0x8] sm:$0xff] %v1591
  %1596 = vst [vmem:[#allocation4 + $0x10] sm:$0xff] %v1592
  %1597 = vst [vmem:[#allocation4 + $0x18] sm:$0xff] %v1593
  %v1598 = vld [vmem:[%s5] sm:$0xf]
  %v1599 = vld [vmem:[#allocation4] ss:$4 sm:$0xff]
  %s1600 = scalar_lea.vmem [#allocation4], 1
  %v1601 = vld [vmem:[%s1600] ss:$4 sm:$0xff]
  %v1603 = vrot.slane %v1598, 1
  %1605 = vmatprep.subr.mxu0 0.0
  %1606 = vmatpush1.xpose.msra.mxu0 0.0
  %1607 = vmatprep.subr.mxu0 0.0
  %1608 = vmatpush1.xpose.msra.mxu0 0.0
  %1609 = vmatprep.subr.mxu0 0.0
  %1610 = vmatpush1.xpose.msra.mxu0 0.0
  %1611 = vmatprep.subr.mxu0 0.0
  %1612 = vmatpush1.xpose.msra.mxu0 0.0
  %1613 = vmatprep.subr.mxu0 0.0
  %1614 = vmatpush1.xpose.msra.mxu0 0.0
  %1615 = vmatprep.subr.mxu0 0.0
  %1616 = vmatpush1.xpose.msra.mxu0 0.0
  %1617 = vmatprep.subr.mxu0 0.0
  %1618 = vmatpush1.xpose.msra.mxu0 0.0
  %1619 = vmatprep.subr.mxu0 0.0
  %1620 = vmatpush1.xpose.msra.mxu0 0.0
  %1621 = vmatprep.subr.mxu0 0.0
  %1622 = vmatpush1.xpose.msra.mxu0 0.0
  %1623 = vmatprep.subr.mxu0 0.0
  %1624 = vmatpush1.xpose.msra.mxu0 0.0
  %1625 = vmatprep.subr.mxu0 0.0
  %1626 = vmatpush1.xpose.msra.mxu0 0.0
  %1627 = vmatprep.subr.mxu0 0.0
  %1628 = vmatpush1.xpose.msra.mxu0 0.0
  %1629 = vmatprep.subr.mxu0 0.0
  %1630 = vmatpush1.xpose.msra.mxu0 0.0
  %1631 = vmatprep.subr.mxu0 0.0
  %1632 = vmatpush1.xpose.msra.mxu0 0.0
  %1633 = vmatprep.subr.mxu0 0.0
  %1634 = vmatpush1.xpose.msra.mxu0 0.0
  %1635 = vmatprep.subr.mxu0 0.0
  %1636 = vmatpush1.xpose.msra.mxu0 %v1601
  %1637 = vmatprep.subr.mxu0 0.0
  %1638 = vmatpush2.xpose.msra.mxu0 0.0
  %1639 = vmatprep.subr.mxu0 0.0
  %1640 = vmatpush2.xpose.msra.mxu0 0.0
  %1641 = vmatprep.subr.mxu0 0.0
  %1642 = vmatpush2.xpose.msra.mxu0 0.0
  %1643 = vmatprep.subr.mxu0 0.0
  %1644 = vmatpush2.xpose.msra.mxu0 0.0
  %1645 = vmatprep.subr.mxu0 0.0
  %1646 = vmatpush2.xpose.msra.mxu0 0.0
  %1647 = vmatprep.subr.mxu0 0.0
  %1648 = vmatpush2.xpose.msra.mxu0 0.0
  %1649 = vmatprep.subr.mxu0 0.0
  %1650 = vmatpush2.xpose.msra.mxu0 0.0
  %1651 = vmatprep.subr.mxu0 0.0
  %1652 = vmatpush2.xpose.msra.mxu0 0.0
  %1653 = vmatprep.subr.mxu0 0.0
  %1654 = vmatpush2.xpose.msra.mxu0 0.0
  %1655 = vmatprep.subr.mxu0 0.0
  %1656 = vmatpush2.xpose.msra.mxu0 0.0
  %1657 = vmatprep.subr.mxu0 0.0
  %1658 = vmatpush2.xpose.msra.mxu0 0.0
  %1659 = vmatprep.subr.mxu0 0.0
  %1660 = vmatpush2.xpose.msra.mxu0 0.0
  %1661 = vmatprep.subr.mxu0 0.0
  %1662 = vmatpush2.xpose.msra.mxu0 0.0
  %1663 = vmatprep.subr.mxu0 0.0
  %1664 = vmatpush2.xpose.msra.mxu0 0.0
  %1665 = vmatprep.subr.mxu0 0.0
  %1666 = vmatpush2.xpose.msra.mxu0 0.0
  %1667 = vmatprep.subr.mxu0 0.0
  %1668 = vmatpush2.xpose.msra.mxu0 0.0
  %1669 = vmatprep.mubr.f32.mxu0 0.0
  %1670 = vmatmul.mubr.f32.gmra.mxu0 %v1603
  %v1671 = vpop.f32.mrf.mxu0
  %v1672 = vadd.f32 0.0, %v1671
  %v1673 = vpop.f32.mrf.mxu0
  %1674 = vdwg.mxu0
  %1675 = vmatprep.subr.mxu0 0.0
  %1676 = vmatpush1.xpose.msra.mxu0 0.0
  %1677 = vmatprep.subr.mxu0 0.0
  %1678 = vmatpush1.xpose.msra.mxu0 0.0
  %1679 = vmatprep.subr.mxu0 0.0
  %1680 = vmatpush1.xpose.msra.mxu0 0.0
  %1681 = vmatprep.subr.mxu0 0.0
  %1682 = vmatpush1.xpose.msra.mxu0 0.0
  %1683 = vmatprep.subr.mxu0 0.0
  %1684 = vmatpush1.xpose.msra.mxu0 0.0
  %1685 = vmatprep.subr.mxu0 0.0
  %1686 = vmatpush1.xpose.msra.mxu0 0.0
  %1687 = vmatprep.subr.mxu0 0.0
  %1688 = vmatpush1.xpose.msra.mxu0 0.0
  %1689 = vmatprep.subr.mxu0 0.0
  %1690 = vmatpush1.xpose.msra.mxu0 0.0
  %1691 = vmatprep.subr.mxu0 0.0
  %1692 = vmatpush1.xpose.msra.mxu0 0.0
  %1693 = vmatprep.subr.mxu0 0.0
  %1694 = vmatpush1.xpose.msra.mxu0 0.0
  %1695 = vmatprep.subr.mxu0 0.0
  %1696 = vmatpush1.xpose.msra.mxu0 0.0
  %1697 = vmatprep.subr.mxu0 0.0
  %1698 = vmatpush1.xpose.msra.mxu0 0.0
  %1699 = vmatprep.subr.mxu0 0.0
  %1700 = vmatpush1.xpose.msra.mxu0 0.0
  %1701 = vmatprep.subr.mxu0 0.0
  %1702 = vmatpush1.xpose.msra.mxu0 0.0
  %1703 = vmatprep.subr.mxu0 0.0
  %1704 = vmatpush1.xpose.msra.mxu0 0.0
  %1705 = vmatprep.subr.mxu0 0.0
  %1706 = vmatpush1.xpose.msra.mxu0 %v1599
  %1707 = vmatprep.subr.mxu0 0.0
  %1708 = vmatpush2.xpose.msra.mxu0 0.0
  %1709 = vmatprep.subr.mxu0 0.0
  %1710 = vmatpush2.xpose.msra.mxu0 0.0
  %1711 = vmatprep.subr.mxu0 0.0
  %1712 = vmatpush2.xpose.msra.mxu0 0.0
  %1713 = vmatprep.subr.mxu0 0.0
  %1714 = vmatpush2.xpose.msra.mxu0 0.0
  %1715 = vmatprep.subr.mxu0 0.0
  %1716 = vmatpush2.xpose.msra.mxu0 0.0
  %1717 = vmatprep.subr.mxu0 0.0
  %1718 = vmatpush2.xpose.msra.mxu0 0.0
  %1719 = vmatprep.subr.mxu0 0.0
  %1720 = vmatpush2.xpose.msra.mxu0 0.0
  %1721 = vmatprep.subr.mxu0 0.0
  %1722 = vmatpush2.xpose.msra.mxu0 0.0
  %1723 = vmatprep.subr.mxu0 0.0
  %1724 = vmatpush2.xpose.msra.mxu0 0.0
  %1725 = vmatprep.subr.mxu0 0.0
  %1726 = vmatpush2.xpose.msra.mxu0 0.0
  %1727 = vmatprep.subr.mxu0 0.0
  %1728 = vmatpush2.xpose.msra.mxu0 0.0
  %1729 = vmatprep.subr.mxu0 0.0
  %1730 = vmatpush2.xpose.msra.mxu0 0.0
  %1731 = vmatprep.subr.mxu0 0.0
  %1732 = vmatpush2.xpose.msra.mxu0 0.0
  %1733 = vmatprep.subr.mxu0 0.0
  %1734 = vmatpush2.xpose.msra.mxu0 0.0
  %1735 = vmatprep.subr.mxu0 0.0
  %1736 = vmatpush2.xpose.msra.mxu0 0.0
  %1737 = vmatprep.subr.mxu0 0.0
  %1738 = vmatpush2.xpose.msra.mxu0 0.0
  %1739 = vmatprep.mubr.f32.mxu0 0.0
  %1740 = vmatmul.mubr.f32.gmra.mxu0 %v1598
  %v1741 = vpop.f32.mrf.mxu0
  %v1742 = vadd.f32 %v1672, %v1741
  %v1743 = vpop.f32.mrf.mxu0
  %1744 = vdwg.mxu0
  %s1745 = scalar_lea.vmem [#allocation4], 2
  %v1746 = vld [vmem:[%s1745] ss:$4 sm:$0xff]
  %v1747 = vrot.slane %v1598, 2
  %1749 = vmatprep.subr.mxu0 0.0
  %1750 = vmatpush1.xpose.msra.mxu0 0.0
  %1751 = vmatprep.subr.mxu0 0.0
  %1752 = vmatpush1.xpose.msra.mxu0 0.0
  %1753 = vmatprep.subr.mxu0 0.0
  %1754 = vmatpush1.xpose.msra.mxu0 0.0
  %1755 = vmatprep.subr.mxu0 0.0
  %1756 = vmatpush1.xpose.msra.mxu0 0.0
  %1757 = vmatprep.subr.mxu0 0.0
  %1758 = vmatpush1.xpose.msra.mxu0 0.0
  %1759 = vmatprep.subr.mxu0 0.0
  %1760 = vmatpush1.xpose.msra.mxu0 0.0
  %1761 = vmatprep.subr.mxu0 0.0
  %1762 = vmatpush1.xpose.msra.mxu0 0.0
  %1763 = vmatprep.subr.mxu0 0.0
  %1764 = vmatpush1.xpose.msra.mxu0 0.0
  %1765 = vmatprep.subr.mxu0 0.0
  %1766 = vmatpush1.xpose.msra.mxu0 0.0
  %1767 = vmatprep.subr.mxu0 0.0
  %1768 = vmatpush1.xpose.msra.mxu0 0.0
  %1769 = vmatprep.subr.mxu0 0.0
  %1770 = vmatpush1.xpose.msra.mxu0 0.0
  %1771 = vmatprep.subr.mxu0 0.0
  %1772 = vmatpush1.xpose.msra.mxu0 0.0
  %1773 = vmatprep.subr.mxu0 0.0
  %1774 = vmatpush1.xpose.msra.mxu0 0.0
  %1775 = vmatprep.subr.mxu0 0.0
  %1776 = vmatpush1.xpose.msra.mxu0 0.0
  %1777 = vmatprep.subr.mxu0 0.0
  %1778 = vmatpush1.xpose.msra.mxu0 0.0
  %1779 = vmatprep.subr.mxu0 0.0
  %1780 = vmatpush1.xpose.msra.mxu0 %v1746
  %1781 = vmatprep.subr.mxu0 0.0
  %1782 = vmatpush2.xpose.msra.mxu0 0.0
  %1783 = vmatprep.subr.mxu0 0.0
  %1784 = vmatpush2.xpose.msra.mxu0 0.0
  %1785 = vmatprep.subr.mxu0 0.0
  %1786 = vmatpush2.xpose.msra.mxu0 0.0
  %1787 = vmatprep.subr.mxu0 0.0
  %1788 = vmatpush2.xpose.msra.mxu0 0.0
  %1789 = vmatprep.subr.mxu0 0.0
  %1790 = vmatpush2.xpose.msra.mxu0 0.0
  %1791 = vmatprep.subr.mxu0 0.0
  %1792 = vmatpush2.xpose.msra.mxu0 0.0
  %1793 = vmatprep.subr.mxu0 0.0
  %1794 = vmatpush2.xpose.msra.mxu0 0.0
  %1795 = vmatprep.subr.mxu0 0.0
  %1796 = vmatpush2.xpose.msra.mxu0 0.0
  %1797 = vmatprep.subr.mxu0 0.0
  %1798 = vmatpush2.xpose.msra.mxu0 0.0
  %1799 = vmatprep.subr.mxu0 0.0
  %1800 = vmatpush2.xpose.msra.mxu0 0.0
  %1801 = vmatprep.subr.mxu0 0.0
  %1802 = vmatpush2.xpose.msra.mxu0 0.0
  %1803 = vmatprep.subr.mxu0 0.0
  %1804 = vmatpush2.xpose.msra.mxu0 0.0
  %1805 = vmatprep.subr.mxu0 0.0
  %1806 = vmatpush2.xpose.msra.mxu0 0.0
  %1807 = vmatprep.subr.mxu0 0.0
  %1808 = vmatpush2.xpose.msra.mxu0 0.0
  %1809 = vmatprep.subr.mxu0 0.0
  %1810 = vmatpush2.xpose.msra.mxu0 0.0
  %1811 = vmatprep.subr.mxu0 0.0
  %1812 = vmatpush2.xpose.msra.mxu0 0.0
  %1813 = vmatprep.mubr.f32.mxu0 0.0
  %1814 = vmatmul.mubr.f32.gmra.mxu0 %v1747
  %v1815 = vpop.f32.mrf.mxu0
  %v1816 = vadd.f32 0.0, %v1815
  %v1817 = vpop.f32.mrf.mxu0
  %1818 = vdwg.mxu0
  %v1819 = vadd.f32 %v1742, %v1816
  %s1820 = scalar_lea.vmem [#allocation4], 3
  %v1821 = vld [vmem:[%s1820] ss:$4 sm:$0xff]
  %v1822 = vrot.slane %v1598, 3
  %1824 = vmatprep.subr.mxu0 0.0
  %1825 = vmatpush1.xpose.msra.mxu0 0.0
  %1826 = vmatprep.subr.mxu0 0.0
  %1827 = vmatpush1.xpose.msra.mxu0 0.0
  %1828 = vmatprep.subr.mxu0 0.0
  %1829 = vmatpush1.xpose.msra.mxu0 0.0
  %1830 = vmatprep.subr.mxu0 0.0
  %1831 = vmatpush1.xpose.msra.mxu0 0.0
  %1832 = vmatprep.subr.mxu0 0.0
  %1833 = vmatpush1.xpose.msra.mxu0 0.0
  %1834 = vmatprep.subr.mxu0 0.0
  %1835 = vmatpush1.xpose.msra.mxu0 0.0
  %1836 = vmatprep.subr.mxu0 0.0
  %1837 = vmatpush1.xpose.msra.mxu0 0.0
  %1838 = vmatprep.subr.mxu0 0.0
  %1839 = vmatpush1.xpose.msra.mxu0 0.0
  %1840 = vmatprep.subr.mxu0 0.0
  %1841 = vmatpush1.xpose.msra.mxu0 0.0
  %1842 = vmatprep.subr.mxu0 0.0
  %1843 = vmatpush1.xpose.msra.mxu0 0.0
  %1844 = vmatprep.subr.mxu0 0.0
  %1845 = vmatpush1.xpose.msra.mxu0 0.0
  %1846 = vmatprep.subr.mxu0 0.0
  %1847 = vmatpush1.xpose.msra.mxu0 0.0
  %1848 = vmatprep.subr.mxu0 0.0
  %1849 = vmatpush1.xpose.msra.mxu0 0.0
  %1850 = vmatprep.subr.mxu0 0.0
  %1851 = vmatpush1.xpose.msra.mxu0 0.0
  %1852 = vmatprep.subr.mxu0 0.0
  %1853 = vmatpush1.xpose.msra.mxu0 0.0
  %1854 = vmatprep.subr.mxu0 0.0
  %1855 = vmatpush1.xpose.msra.mxu0 %v1821
  %1856 = vmatprep.subr.mxu0 0.0
  %1857 = vmatpush2.xpose.msra.mxu0 0.0
  %1858 = vmatprep.subr.mxu0 0.0
  %1859 = vmatpush2.xpose.msra.mxu0 0.0
  %1860 = vmatprep.subr.mxu0 0.0
  %1861 = vmatpush2.xpose.msra.mxu0 0.0
  %1862 = vmatprep.subr.mxu0 0.0
  %1863 = vmatpush2.xpose.msra.mxu0 0.0
  %1864 = vmatprep.subr.mxu0 0.0
  %1865 = vmatpush2.xpose.msra.mxu0 0.0
  %1866 = vmatprep.subr.mxu0 0.0
  %1867 = vmatpush2.xpose.msra.mxu0 0.0
  %1868 = vmatprep.subr.mxu0 0.0
  %1869 = vmatpush2.xpose.msra.mxu0 0.0
  %1870 = vmatprep.subr.mxu0 0.0
  %1871 = vmatpush2.xpose.msra.mxu0 0.0
  %1872 = vmatprep.subr.mxu0 0.0
  %1873 = vmatpush2.xpose.msra.mxu0 0.0
  %1874 = vmatprep.subr.mxu0 0.0
  %1875 = vmatpush2.xpose.msra.mxu0 0.0
  %1876 = vmatprep.subr.mxu0 0.0
  %1877 = vmatpush2.xpose.msra.mxu0 0.0
  %1878 = vmatprep.subr.mxu0 0.0
  %1879 = vmatpush2.xpose.msra.mxu0 0.0
  %1880 = vmatprep.subr.mxu0 0.0
  %1881 = vmatpush2.xpose.msra.mxu0 0.0
  %1882 = vmatprep.subr.mxu0 0.0
  %1883 = vmatpush2.xpose.msra.mxu0 0.0
  %1884 = vmatprep.subr.mxu0 0.0
  %1885 = vmatpush2.xpose.msra.mxu0 0.0
  %1886 = vmatprep.subr.mxu0 0.0
  %1887 = vmatpush2.xpose.msra.mxu0 0.0
  %1888 = vmatprep.mubr.f32.mxu0 0.0
  %1889 = vmatmul.mubr.f32.gmra.mxu0 %v1822
  %v1890 = vpop.f32.mrf.mxu0
  %v1891 = vadd.f32 0.0, %v1890
  %v1892 = vpop.f32.mrf.mxu0
  %1893 = vdwg.mxu0
  %v1894 = vadd.f32 %v1819, %v1891
  %v1895 = vld [vmem:[#allocation5] sm:$0x1]
  %1897 = vset.pattern.permute.xlu0 0
  %1898 = vperm.xlu0 %1897, %v1895
  %v1899 = vpop.permute.xlu0 %1898
  %v1901 = vlaneseq
  %v1902 = vshrl.u32 %v1901, 7
  %v1903 = vsub.s32 0, %v1902
  %v1904 = vrot.slane %v1899, %v1903
  %v1905 = vadd.f32 %v1894, %v1904
  %vm1906 = vcmask 57344
  %1907 = vst.msk [vmem:[%s7] sm:$0x1] %vm1906, %v1905
  // Predicated region
  $region30: #{discriminator_forward.1} parent=0 // pred_check
    _
  $region31: #{discriminator_forward.1} parent=0 // pred_check_branch
    %1909 = sbr.rel (0) target = $region33
  $region32: #{discriminator_forward.1} parent=0 // pred_region
    _
  $region33: #{discriminator_forward.1} parent=0 // pred_fallthru
    _
  // Predicated region
  $region34: #{discriminator_forward.1} parent=0 // pred_check
    _
  $region35: #{discriminator_forward.1} parent=0 // pred_check_branch
    %1911 = sbr.rel (0) target = $region37
  $region36: #{discriminator_forward.1} parent=0 // pred_region
    _
  $region37: #{discriminator_forward.1} parent=0 // pred_fallthru
    _

</llo_original>
